<compile_context>
chip_gen: v6e
topology: v6e:2x2x1
jax: 0.10.0
libtpu: 0.0.40
codegen_flags: <defaults>
</compile_context>

<pallas_src>
import functools
import math

import jax
import jax.numpy as jnp
from jax.experimental import pallas as pl
from jax.experimental.pallas import tpu as pltpu


# ---------------------------------------------------------------------------
# small math helpers (kernel-safe)
# ---------------------------------------------------------------------------
def _mm(a, b):
    """MXU matmul: bf16 operands, f32 accumulation."""
    return jnp.dot(a.astype(jnp.bfloat16), b.astype(jnp.bfloat16),
                   preferred_element_type=jnp.float32)


def _layernorm(v, g, b, eps=1e-5):
    mu = jnp.mean(v, axis=-1, keepdims=True)
    var = jnp.mean((v - mu) ** 2, axis=-1, keepdims=True)
    return (v - mu) * jax.lax.rsqrt(var + eps) * g + b


def _gelu(v):
    # TODO(synk): PyTorch nn.GELU defaults to the erf form; tanh approximation
    # is used for Mosaic-safe lowering (~1e-3 activation-level difference).
    c = 0.7978845608028654  # sqrt(2/pi)
    return 0.5 * v * (1.0 + jnp.tanh(c * (v + 0.044715 * v * v * v)))


def _sigmoid_fast(v):
    # EUP exp + approx reciprocal (in-kernel only).
    return pl.reciprocal(1.0 + jnp.exp(-v), approx=True)


# ---------------------------------------------------------------------------
# Kernel A: dense multi-head self-attention + graph-conv per-node projections
#   grid: target-node tiles (parallel)
# ---------------------------------------------------------------------------
def _attn_proj_kernel(h, hd, d, *refs):
    (x_ref, xn_ref, k1t_ref, v1_ref,
     wq_t, bq, wo_t, bo, ln2g, ln2b,
     gq_t, gqb, gk_t, gkb, gv_t, gvb, gs_t, gsb,
     x1_ref, qg_ref, kg_ref, vg_ref, xr_ref) = refs

    x0 = x_ref[...]                       # [T, d]  residual
    xn = xn_ref[...]                      # [T, d]  norm1(x) tile
    k1t = k1t_ref[...]                    # [d, n]  pre-transposed keys (all nodes)
    v1 = v1_ref[...]                      # [n, d]  values (all nodes)

    # ---- dense multi-head self-attention (pre-norm, no mask) ----
    # 1/sqrt(head_dim) folded into q (matches torch MultiheadAttention).
    q = (_mm(xn, wq_t[...]) + bq[...]) * (1.0 / math.sqrt(hd))
    attn = jnp.zeros(x0.shape, jnp.float32)
    for i in range(h):                    # static loop; hd is tiny -> 2D matmuls
        sl = slice(i * hd, (i + 1) * hd)
        s = _mm(q[:, sl], k1t[sl, :])                                # [T, n]
        p = jnp.exp(s - jnp.max(s, axis=-1, keepdims=True))
        p = p * pl.reciprocal(jnp.sum(p, axis=-1, keepdims=True), approx=True)
        oh = _mm(p, v1[:, sl])                                       # [T, hd]
        attn = attn + _mm(oh, wo_t[sl, :])                           # out_proj slice
    x1 = x0 + attn + bo[...]
    x1_ref[...] = x1

    # ---- TransformerConv per-node projections (lin_query/key/value/skip) ----
    x2n = _layernorm(x1, ln2g[...], ln2b[...])
    gscale = 1.0 / math.sqrt(d)           # out_channels per head == d
    qg_ref[...] = (_mm(x2n, gq_t[...]) + gqb[...]) * gscale          # scale folded
    kg_ref[...] = _mm(x2n, gk_t[...]) + gkb[...]
    vg_ref[...] = _mm(x2n, gv_t[...]) + gvb[...]
    xr_ref[...] = _mm(x2n, gs_t[...]) + gsb[...]


# ---------------------------------------------------------------------------
# Kernel B: graph attention (edge-aware) + beta gate + FFN + dynamic update
#   grid: target-node tiles (parallel); edge_dense streamed per tile
# ---------------------------------------------------------------------------
def _graph_ffn_kernel(h, d, use_einsum, *refs):
    (x0_ref, x1_ref, qg_ref, xr_ref, adj_ref, ed_ref, kgt_ref, vg_ref,
     gew, gew_t, gbw, ln3g, ln3b, f1_t, f1b, f2_t, f2b, dw1_t, dw2_t, db,
     o_ref, qt_sc, al_sc) = refs

    qg = qg_ref[...]                      # [T, h*d]  (already scaled by 1/sqrt(d))
    adj = adj_ref[...]                    # [T, n]    0/1 edge mask (target, source)
    ed = ed_ref[...]                      # [T, n, d] raw edge features (bf16)
    kgt = kgt_ref[...]                    # [h*d, n]
    vg = vg_ref[...]                      # [n, h*d]
    tq = qg.shape[0]

    # pass 0: per-head edge-projected queries  q~_h = q_h @ We_h  (uses the
    # original [h*d, d_edge] layout of lin_edge, so no transpose is needed).
    for i in range(h):
        qt_sc[:, i, :] = _mm(qg[:, i * d:(i + 1) * d], gew[i * d:(i + 1) * d, :])
    qt_all = qt_sc[...]                   # [T, h, d_edge]

    edf = None
    if use_einsum:
        # score edge-term for all heads: batched matmul over target rows.
        qe_all = jnp.einsum('thc,tsc->ths', qt_all.astype(jnp.bfloat16), ed,
                            preferred_element_type=jnp.float32)      # [T, h, n]
    else:
        edf = ed.astype(jnp.float32)

    # pass 1: scores, masked softmax (PyG scatter-softmax semantics), aggregation
    gacc = jnp.zeros((tq, d), jnp.float32)
    for i in range(h):
        sl = slice(i * d, (i + 1) * d)
        if use_einsum:
            qe_i = qe_all[:, i, :]
        else:
            qe_i = jnp.sum(qt_all[:, i, :][:, None, :] * edf, axis=-1)
        s = _mm(qg[:, sl], kgt[sl, :]) + qe_i                         # [T, n]
        s = jnp.where(adj > 0, s, jnp.float32(-1e30))
        p = jnp.exp(s - jnp.max(s, axis=-1, keepdims=True)) * adj
        denom = jnp.maximum(jnp.sum(p, axis=-1, keepdims=True), 1e-20)
        alpha = p * pl.reciprocal(denom, approx=True)   # zero-in-degree rows -> 0
        gacc = gacc + _mm(alpha, vg[:, sl])
        if use_einsum:
            al_sc[:, i, :] = alpha
        else:
            w_i = jnp.sum(alpha[:, :, None] * edf, axis=1)            # [T, d_edge]
            gacc = gacc + _mm(w_i, gew_t[:, sl])

    # pass 2: edge contribution to the messages:  (alpha^T e) @ We_h
    if use_einsum:
        w_all = jnp.einsum('ths,tsc->thc', al_sc[...].astype(jnp.bfloat16), ed,
                           preferred_element_type=jnp.float32)        # [T, h, d_edge]
        for i in range(h):
            gacc = gacc + _mm(w_all[:, i, :], gew_t[:, i * d:(i + 1) * d])

    gout = gacc * (1.0 / h)               # concat=False -> mean over heads

    # ---- beta-gated root/skip connection (lin_skip + lin_beta, bias=False) ----
    xr = xr_ref[...]
    gb = gbw[...]
    beta = (jnp.sum(gout * gb[:, :d], axis=-1, keepdims=True)
            + jnp.sum(xr * gb[:, d:2 * d], axis=-1, keepdims=True)
            + jnp.sum((gout - xr) * gb[:, 2 * d:], axis=-1, keepdims=True))
    beta = _sigmoid_fast(beta)
    x2 = x1_ref[...] + beta * xr + (1.0 - beta) * gout

    # ---- FFN ----
    x3n = _layernorm(x2, ln3g[...], ln3b[...])
    hid = _gelu(_mm(x3n, f1_t[...]) + f1b[...])
    x3 = x2 + _mm(hid, f2_t[...]) + f2b[...]

    # ---- dynamic gated update: sigmoid(W [x3, residual]) ----
    x0 = x0_ref[...]
    gate = _sigmoid_fast(_mm(x3, dw1_t[...]) + _mm(x0, dw2_t[...]) + db[...])
    o_ref[...] = (x3 * gate + x0 * (1.0 - gate)).astype(o_ref.dtype)


# ---------------------------------------------------------------------------
# wrapper
# ---------------------------------------------------------------------------
def _pick_tile_n(n, d, budget_bytes=4 << 20):
    """Largest multiple-of-8 divisor of n whose edge tile (bf16) fits the budget.

    Budget is per buffer; with double-buffering + scratch this keeps kernel B
    comfortably inside v7x's 64 MiB VMEM (and v5e/v6e's 128 MiB).
    """
    if n % 8 != 0:
        return n  # TODO(synk): pad + mask instead of falling back to one tile.
    cap = max(8, budget_bytes // max(1, n * d * 2))
    best = 8 if n % 8 == 0 else n
    for t in range(8, n + 1, 8):
        if n % t == 0 and t <= cap:
            best = t
    return min(best, n)


def dynamic_graph_transformer_layer(x, adj, edge_dense, params, num_heads,
                                    tile_n=None):
    n, d = x.shape
    h = num_heads
    hd = d // h
    assert d % h == 0

    if tile_n is None:
        tile_n = _pick_tile_n(n, d)
    assert n % tile_n == 0 and (tile_n % 8 == 0 or tile_n == n), (n, tile_n)
    grid = (n // tile_n,)
    f32 = jnp.float32

    # ---- pre-transpose weights host-side (no in-kernel .T / relayouts) ----
    wq_t, wk_t = params["wq"].T, params["wk"].T
    wv_t, wo_t = params["wv"].T, params["wo"].T
    gq_t, gk_t, gv_t = params["gqw"].T, params["gkw"].T, params["gvw"].T
    gs_t = params["gsw"].T
    gew = params["gew"]                    # [h*d, d_edge] original layout
    gew_t = params["gew"].T                # [d_edge, h*d]
    f1_t, f2_t = params["f1w"].T, params["f2w"].T
    dw1_t = params["dw"][:, :d].T
    dw2_t = params["dw"][:, d:].T

    # ---- XLA glue: norm1 + dense-attention keys/values for ALL nodes ----
    # (needed globally by every target tile; tiny [N, D] GEMMs, XLA handles them)
    xn1 = _layernorm(x, params["ln1g"], params["ln1b"])
    k1t = (xn1 @ wk_t + params["bk"]).T            # [d, n]
    v1 = xn1 @ wv_t + params["bv"]                 # [n, d]

    row_spec = lambda w: pl.BlockSpec((tile_n, w), lambda i: (i, 0))
    full = lambda a: pl.BlockSpec(a.shape, lambda i, nd=a.ndim: (0,) * nd)
    cparams = pltpu.CompilerParams(dimension_semantics=("parallel",),
                                   vmem_limit_bytes=48 << 20)

    # ---- kernel A: dense MHA + graph-conv projections (tiled over targets) ----
    a_inputs = [x, xn1, k1t, v1,
                wq_t, params["bq"], wo_t, params["bo"],
                params["ln2g"], params["ln2b"],
                gq_t, params["gqb"], gk_t, params["gkb"],
                gv_t, params["gvb"], gs_t, params["gsb"]]
    a_in_specs = ([row_spec(d), row_spec(d), full(k1t), full(v1)]
                  + [full(w) for w in a_inputs[4:]])
    a_out_shape = (jax.ShapeDtypeStruct((n, d), f32),
                   jax.ShapeDtypeStruct((n, h * d), f32),
                   jax.ShapeDtypeStruct((n, h * d), f32),
                   jax.ShapeDtypeStruct((n, h * d), f32),
                   jax.ShapeDtypeStruct((n, d), f32))
    a_out_specs = (row_spec(d), row_spec(h * d), row_spec(h * d),
                   row_spec(h * d), row_spec(d))

    x1, qg, kg, vg, xr = pl.pallas_call(
        functools.partial(_attn_proj_kernel, h, hd, d),
        grid=grid,
        in_specs=a_in_specs,
        out_specs=a_out_specs,
        out_shape=a_out_shape,
        compiler_params=cparams,
    )(*a_inputs)

    # graph-attention sources are needed by every target tile: small, keep whole.
    kgt = kg.T                                      # [h*d, n]
    ed_bf16 = edge_dense.astype(jnp.bfloat16)       # halve the dominant HBM stream

    # ---- kernel B: graph attention + beta gate + FFN + dynamic update ----
    b_inputs = [x, x1, qg, xr, adj, ed_bf16, kgt, vg,
                gew, gew_t, params["gbw"], params["ln3g"], params["ln3b"],
                f1_t, params["f1b"], f2_t, params["f2b"],
                dw1_t, dw2_t, params["db"]]
    b_in_specs = ([row_spec(d), row_spec(d), row_spec(h * d), row_spec(d),
                   pl.BlockSpec((tile_n, n), lambda i: (i, 0)),
                   pl.BlockSpec((tile_n, n, d), lambda i: (i, 0, 0)),
                   full(kgt), full(vg)]
                  + [full(w) for w in b_inputs[8:]])

    def run_kernel_b(use_einsum):
        return pl.pallas_call(
            functools.partial(_graph_ffn_kernel, h, d, use_einsum),
            grid=grid,
            in_specs=b_in_specs,
            out_specs=row_spec(d),
            out_shape=jax.ShapeDtypeStruct((n, d), f32),
            scratch_shapes=[pltpu.VMEM((tile_n, h, d), jnp.float32),   # q~ per head
                            pltpu.VMEM((tile_n, h, n), jnp.float32)],  # alpha per head
            compiler_params=cparams,
        )(*b_inputs)

    try:
        out = run_kernel_b(True)          # batched-einsum (MXU) edge contractions
    except Exception:
        # Fallback: per-head broadcast-reduce on raw edge features (still per-tile,
        # still no eg materialisation) for Mosaic builds without batched dot_general.
        out = run_kernel_b(False)
    return out


# ---------------------------------------------------------------------------
# pure-JAX reference (original formulation, exact f32) for correctness checks
# ---------------------------------------------------------------------------
def _reference(x, adj, edge_dense, params, h):
    n, d = x.shape
    hd = d // h
    sig = lambda v: 1.0 / (1.0 + jnp.exp(-v))

    def ln(v, g, b, eps=1e-5):
        mu = jnp.mean(v, -1, keepdims=True)
        var = jnp.mean((v - mu) ** 2, -1, keepdims=True)
        return (v - mu) / jnp.sqrt(var + eps) * g + b

    # 1) dense multi-head self-attention (pre-norm)
    xn = ln(x, params["ln1g"], params["ln1b"])
    q = xn @ params["wq"].T + params["bq"]
    k = xn @ params["wk"].T + params["bk"]
    v = xn @ params["wv"].T + params["bv"]
    attn = jnp.zeros_like(x)
    for i in range(h):
        sl = slice(i * hd, (i + 1) * hd)
        s = (q[:, sl] @ k[:, sl].T) / math.sqrt(hd)
        p = jax.nn.softmax(s, axis=-1)
        attn = attn + (p @ v[:, sl]) @ params["wo"][:, sl].T
    x1 = x + attn + params["bo"]

    # 2) PyG TransformerConv (edge_dim=d, concat=False, beta=True)
    x2n = ln(x1, params["ln2g"], params["ln2b"])
    qg = x2n @ params["gqw"].T + params["gqb"]
    kg = x2n @ params["gkw"].T + params["gkb"]
    vg = x2n @ params["gvw"].T + params["gvb"]
    eg = (edge_dense.reshape(n * n, d) @ params["gew"].T).reshape(n, n, h * d)
    gout = jnp.zeros_like(x)
    for i in range(h):
        sl = slice(i * d, (i + 1) * d)
        eh = eg[:, :, sl]
        s = (qg[:, sl] @ kg[:, sl].T
             + jnp.sum(qg[:, sl][:, None, :] * eh, -1)) / math.sqrt(d)
        s = jnp.where(adj > 0, s, -1e30)
        p = jnp.exp(s - jnp.max(s, -1, keepdims=True)) * adj
        alpha = p / jnp.maximum(jnp.sum(p, -1, keepdims=True), 1e-20)
        gout = gout + alpha @ vg[:, sl] + jnp.sum(alpha[:, :, None] * eh, 1)
    gout = gout / h
    xr = x2n @ params["gsw"].T + params["gsb"]
    gb = params["gbw"]
    beta = sig(jnp.sum(gout * gb[:, :d], -1, keepdims=True)
               + jnp.sum(xr * gb[:, d:2 * d], -1, keepdims=True)
               + jnp.sum((gout - xr) * gb[:, 2 * d:], -1, keepdims=True))
    x2 = x1 + beta * xr + (1.0 - beta) * gout

    # 3) FFN (tanh-GELU, same approximation as the kernel)
    x3n = ln(x2, params["ln3g"], params["ln3b"])
    c = 0.7978845608028654
    hid = x3n @ params["f1w"].T + params["f1b"]
    hid = 0.5 * hid * (1.0 + jnp.tanh(c * (hid + 0.044715 * hid ** 3)))
    x3 = x2 + hid @ params["f2w"].T + params["f2b"]

    # 4) dynamic gated update
    gate = sig(x3 @ params["dw"][:, :d].T + x @ params["dw"][:, d:].T + params["db"])
    return x3 * gate + x * (1.0 - gate)


# ---------------------------------------------------------------------------
# deterministic parameter construction
# ---------------------------------------------------------------------------
def init_params(key, d, h, ffn_dim):
    ks = jax.random.split(key, 24)
    nrm = lambda k, shape, s=0.05: jax.random.normal(k, shape, jnp.float32) * s
    return {
        # multi-head self-attention (in_proj split into q/k/v) + out_proj
        "wq": nrm(ks[0], (d, d)), "bq": nrm(ks[1], (1, d)),
        "wk": nrm(ks[2], (d, d)), "bk": nrm(ks[3], (1, d)),
        "wv": nrm(ks[4], (d, d)), "bv": nrm(ks[5], (1, d)),
        "wo": nrm(ks[6], (d, d)), "bo": nrm(ks[7], (1, d)),
        # LayerNorms
        "ln1g": 1.0 + nrm(ks[8], (1, d), 0.01), "ln1b": nrm(ks[8], (1, d), 0.01),
        "ln2g": 1.0 + nrm(ks[9], (1, d), 0.01), "ln2b": nrm(ks[9], (1, d), 0.01),
        "ln3g": 1.0 + nrm(ks[10], (1, d), 0.01), "ln3b": nrm(ks[10], (1, d), 0.01),
        # PyG TransformerConv: lin_query/key/value [H*D, D], lin_edge (no bias),
        # lin_skip [D, D], lin_beta [1, 3D] (no bias)
        "gqw": nrm(ks[11], (h * d, d)), "gqb": nrm(ks[12], (1, h * d)),
        "gkw": nrm(ks[13], (h * d, d)), "gkb": nrm(ks[14], (1, h * d)),
        "gvw": nrm(ks[15], (h * d, d)), "gvb": nrm(ks[16], (1, h * d)),
        "gew": nrm(ks[17], (h * d, d)),
        "gsw": nrm(ks[18], (d, d)), "gsb": nrm(ks[19], (1, d)),
        "gbw": nrm(ks[20], (1, 3 * d)),
        # FFN
        "f1w": nrm(ks[21], (ffn_dim, d)), "f1b": nrm(ks[21], (1, ffn_dim)),
        "f2w": nrm(ks[22], (d, ffn_dim)), "f2b": nrm(ks[22], (1, d)),
        # dynamic_update: Linear(2D -> D)
        "dw": nrm(ks[23], (d, 2 * d)), "db": nrm(ks[23], (1, d)),
    }


if __name__ == "__main__":
    # small synthetic config: dim=32, heads=4, ffn=64, 16 nodes, 32 edges
    N, D, H, FFN = 16, 32, 4, 64

    key = jax.random.PRNGKey(0)
    kx, ke, kp = jax.random.split(key, 3)

    x = jax.random.normal(kx, (N, D), jnp.float32)

    # deterministic edge list: node i receives edges from (i+1)%N and (i+5)%N
    src = jnp.concatenate([(jnp.arange(N) + 1) % N, (jnp.arange(N) + 5) % N])
    dst = jnp.concatenate([jnp.arange(N), jnp.arange(N)])
    edge_index = jnp.stack([src, dst]).astype(jnp.int32)          # [2, E]
    E = edge_index.shape[1]
    edge_attr = jax.random.normal(ke, (E, D), jnp.float32)        # edge_dim == dim

    # densify graph (glue, outside the kernels): [target, source(, feat)]
    adj = jnp.zeros((N, N), jnp.float32).at[edge_index[1], edge_index[0]].set(1.0)
    edge_dense = jnp.zeros((N, N, D), jnp.float32).at[
        edge_index[1], edge_index[0]].set(edge_attr)

    params = init_params(kp, D, H, FFN)

    # tile_n=8 -> 2 grid steps, exercises the tiled/pipelined path
    out = dynamic_graph_transformer_layer(x, adj, edge_dense, params, H, tile_n=8)
    out = jax.block_until_ready(out)

    ref = _reference(x, adj, edge_dense, params, H)
    err = float(jnp.max(jnp.abs(out - ref)))

    assert out.shape == (N, D)
    assert bool(jnp.all(jnp.isfinite(out)))
    # kernel uses bf16 matmul operands + approx reciprocals vs exact f32 reference
    assert err < 3e-2, f"max abs error {err}"
    print("KERNEL_OK")
</pallas_src>

<mosaic_0001>
module attributes {stable_mosaic.version = 11 : i64} {
  func.func @_attn_proj_kernel(%arg0: i32, %arg1: memref<8x32xf32, #tpu.memory_space<vmem>>, %arg2: memref<8x32xf32, #tpu.memory_space<vmem>>, %arg3: memref<32x16xf32, #tpu.memory_space<vmem>>, %arg4: memref<16x32xf32, #tpu.memory_space<vmem>>, %arg5: memref<32x32xf32, #tpu.memory_space<vmem>>, %arg6: memref<1x32xf32, #tpu.memory_space<vmem>>, %arg7: memref<32x32xf32, #tpu.memory_space<vmem>>, %arg8: memref<1x32xf32, #tpu.memory_space<vmem>>, %arg9: memref<1x32xf32, #tpu.memory_space<vmem>>, %arg10: memref<1x32xf32, #tpu.memory_space<vmem>>, %arg11: memref<32x128xf32, #tpu.memory_space<vmem>>, %arg12: memref<1x128xf32, #tpu.memory_space<vmem>>, %arg13: memref<32x128xf32, #tpu.memory_space<vmem>>, %arg14: memref<1x128xf32, #tpu.memory_space<vmem>>, %arg15: memref<32x128xf32, #tpu.memory_space<vmem>>, %arg16: memref<1x128xf32, #tpu.memory_space<vmem>>, %arg17: memref<32x32xf32, #tpu.memory_space<vmem>>, %arg18: memref<1x32xf32, #tpu.memory_space<vmem>>, %arg19: memref<8x32xf32, #tpu.memory_space<vmem>>, %arg20: memref<8x128xf32, #tpu.memory_space<vmem>>, %arg21: memref<8x128xf32, #tpu.memory_space<vmem>>, %arg22: memref<8x128xf32, #tpu.memory_space<vmem>>, %arg23: memref<8x32xf32, #tpu.memory_space<vmem>>) attributes {dimension_semantics = [#tpu.dimension_semantics<parallel>], iteration_bounds = array<i64: 2>, scalar_prefetch = 0 : i64, scratch_operands = 0 : i64, tpu.core_type = #tpu.core_type<tc>, window_params = [{transform_indices = @transform_0, window_bounds = array<i64: 8, 32>}, {transform_indices = @transform_1, window_bounds = array<i64: 8, 32>}, {pipeline_mode = #tpu.pipeline_mode<synchronous>, transform_indices = @transform_2, window_bounds = array<i64: 32, 16>}, {pipeline_mode = #tpu.pipeline_mode<synchronous>, transform_indices = @transform_3, window_bounds = array<i64: 16, 32>}, {pipeline_mode = #tpu.pipeline_mode<synchronous>, transform_indices = @transform_4, window_bounds = array<i64: 32, 32>}, {pipeline_mode = #tpu.pipeline_mode<synchronous>, transform_indices = @transform_5, window_bounds = array<i64: 1, 32>}, {pipeline_mode = #tpu.pipeline_mode<synchronous>, transform_indices = @transform_6, window_bounds = array<i64: 32, 32>}, {pipeline_mode = #tpu.pipeline_mode<synchronous>, transform_indices = @transform_7, window_bounds = array<i64: 1, 32>}, {pipeline_mode = #tpu.pipeline_mode<synchronous>, transform_indices = @transform_8, window_bounds = array<i64: 1, 32>}, {pipeline_mode = #tpu.pipeline_mode<synchronous>, transform_indices = @transform_9, window_bounds = array<i64: 1, 32>}, {pipeline_mode = #tpu.pipeline_mode<synchronous>, transform_indices = @transform_10, window_bounds = array<i64: 32, 128>}, {pipeline_mode = #tpu.pipeline_mode<synchronous>, transform_indices = @transform_11, window_bounds = array<i64: 1, 128>}, {pipeline_mode = #tpu.pipeline_mode<synchronous>, transform_indices = @transform_12, window_bounds = array<i64: 32, 128>}, {pipeline_mode = #tpu.pipeline_mode<synchronous>, transform_indices = @transform_13, window_bounds = array<i64: 1, 128>}, {pipeline_mode = #tpu.pipeline_mode<synchronous>, transform_indices = @transform_14, window_bounds = array<i64: 32, 128>}, {pipeline_mode = #tpu.pipeline_mode<synchronous>, transform_indices = @transform_15, window_bounds = array<i64: 1, 128>}, {pipeline_mode = #tpu.pipeline_mode<synchronous>, transform_indices = @transform_16, window_bounds = array<i64: 32, 32>}, {pipeline_mode = #tpu.pipeline_mode<synchronous>, transform_indices = @transform_17, window_bounds = array<i64: 1, 32>}, {transform_indices = @transform_18, window_bounds = array<i64: 8, 32>}, {transform_indices = @transform_19, window_bounds = array<i64: 8, 128>}, {transform_indices = @transform_20, window_bounds = array<i64: 8, 128>}, {transform_indices = @transform_21, window_bounds = array<i64: 8, 128>}, {transform_indices = @transform_22, window_bounds = array<i64: 8, 32>}]} {
    %c0 = arith.constant 0 : index
    %c0_0 = arith.constant 0 : index
    %0 = vector.load %arg1[%c0, %c0_0] : memref<8x32xf32, #tpu.memory_space<vmem>>, vector<8x32xf32>
    %c0_1 = arith.constant 0 : index
    %c0_2 = arith.constant 0 : index
    %1 = vector.load %arg2[%c0_1, %c0_2] : memref<8x32xf32, #tpu.memory_space<vmem>>, vector<8x32xf32>
    %c0_3 = arith.constant 0 : index
    %c0_4 = arith.constant 0 : index
    %2 = vector.load %arg3[%c0_3, %c0_4] : memref<32x16xf32, #tpu.memory_space<vmem>>, vector<32x16xf32>
    %c0_5 = arith.constant 0 : index
    %c0_6 = arith.constant 0 : index
    %3 = vector.load %arg4[%c0_5, %c0_6] : memref<16x32xf32, #tpu.memory_space<vmem>>, vector<16x32xf32>
    %c0_7 = arith.constant 0 : index
    %c0_8 = arith.constant 0 : index
    %4 = vector.load %arg5[%c0_7, %c0_8] : memref<32x32xf32, #tpu.memory_space<vmem>>, vector<32x32xf32>
    %5 = arith.truncf %1 : vector<8x32xf32> to vector<8x32xbf16>
    %6 = arith.truncf %4 : vector<32x32xf32> to vector<32x32xbf16>
    %cst = arith.constant dense<0.000000e+00> : vector<8x32xf32>
    %7 = tpu.matmul %5, %6, %cst {dimension_numbers = #tpu.dot_dimension_numbers<[1], [0], [0], [1], [0, 0, 1, 1], [], []>} : vector<8x32xbf16>, vector<32x32xbf16>, vector<8x32xf32> -> vector<8x32xf32>
    %c0_9 = arith.constant 0 : index
    %c0_10 = arith.constant 0 : index
    %8 = vector.load %arg6[%c0_9, %c0_10] : memref<1x32xf32, #tpu.memory_space<vmem>>, vector<1x32xf32>
    %9 = vector.broadcast %8 : vector<1x32xf32> to vector<8x32xf32>
    %10 = arith.addf %7, %9 : vector<8x32xf32>
    %cst_11 = arith.constant 0.353553385 : f32
    %11 = vector.broadcast %cst_11 : f32 to vector<8x32xf32>
    %12 = arith.mulf %10, %11 : vector<8x32xf32>
    %cst_12 = arith.constant 0.000000e+00 : f32
    %13 = vector.broadcast %cst_12 : f32 to vector<8x32xf32>
    %14 = vector.extract_strided_slice %12 {offsets = [0, 0], sizes = [8, 8], strides = [1, 1]} : vector<8x32xf32> to vector<8x8xf32>
    %15 = vector.extract_strided_slice %2 {offsets = [0, 0], sizes = [8, 16], strides = [1, 1]} : vector<32x16xf32> to vector<8x16xf32>
    %16 = arith.truncf %14 : vector<8x8xf32> to vector<8x8xbf16>
    %17 = arith.truncf %15 : vector<8x16xf32> to vector<8x16xbf16>
    %cst_13 = arith.constant dense<0.000000e+00> : vector<8x16xf32>
    %18 = tpu.matmul %16, %17, %cst_13 {dimension_numbers = #tpu.dot_dimension_numbers<[1], [0], [0], [1], [0, 0, 1, 1], [], []>} : vector<8x8xbf16>, vector<8x16xbf16>, vector<8x16xf32> -> vector<8x16xf32>
    %cst_14 = arith.constant dense<0xFF800000> : vector<8xf32>
    %19 = vector.multi_reduction <maximumf>, %18, %cst_14 [1] : vector<8x16xf32> to vector<8xf32>
    %20 = vector.shape_cast %19 : vector<8xf32> to vector<8x1xf32>
    %21 = vector.broadcast %20 : vector<8x1xf32> to vector<8x16xf32>
    %22 = arith.subf %18, %21 : vector<8x16xf32>
    %23 = math.exp %22 : vector<8x16xf32>
    %cst_15 = arith.constant dense<0.000000e+00> : vector<8xf32>
    %24 = vector.multi_reduction <add>, %23, %cst_15 [1] : vector<8x16xf32> to vector<8xf32>
    %25 = vector.shape_cast %24 : vector<8xf32> to vector<8x1xf32>
    %26 = tpu.reciprocal %25 {approx = true} : vector<8x1xf32> -> vector<8x1xf32>
    %27 = vector.broadcast %26 : vector<8x1xf32> to vector<8x16xf32>
    %28 = arith.mulf %23, %27 : vector<8x16xf32>
    %29 = vector.extract_strided_slice %3 {offsets = [0, 0], sizes = [16, 8], strides = [1, 1]} : vector<16x32xf32> to vector<16x8xf32>
    %30 = arith.truncf %28 : vector<8x16xf32> to vector<8x16xbf16>
    %31 = arith.truncf %29 : vector<16x8xf32> to vector<16x8xbf16>
    %cst_16 = arith.constant dense<0.000000e+00> : vector<8x8xf32>
    %32 = tpu.matmul %30, %31, %cst_16 {dimension_numbers = #tpu.dot_dimension_numbers<[1], [0], [0], [1], [0, 0, 1, 1], [], []>} : vector<8x16xbf16>, vector<16x8xbf16>, vector<8x8xf32> -> vector<8x8xf32>
    %c0_17 = arith.constant 0 : index
    %c0_18 = arith.constant 0 : index
    %33 = vector.load %arg7[%c0_17, %c0_18] : memref<32x32xf32, #tpu.memory_space<vmem>>, vector<8x32xf32>
    %34 = arith.truncf %32 : vector<8x8xf32> to vector<8x8xbf16>
    %35 = arith.truncf %33 : vector<8x32xf32> to vector<8x32xbf16>
    %cst_19 = arith.constant dense<0.000000e+00> : vector<8x32xf32>
    %36 = tpu.matmul %34, %35, %cst_19 {dimension_numbers = #tpu.dot_dimension_numbers<[1], [0], [0], [1], [0, 0, 1, 1], [], []>} : vector<8x8xbf16>, vector<8x32xbf16>, vector<8x32xf32> -> vector<8x32xf32>
    %37 = arith.addf %13, %36 : vector<8x32xf32>
    %38 = vector.extract_strided_slice %12 {offsets = [0, 8], sizes = [8, 8], strides = [1, 1]} : vector<8x32xf32> to vector<8x8xf32>
    %39 = vector.extract_strided_slice %2 {offsets = [8, 0], sizes = [8, 16], strides = [1, 1]} : vector<32x16xf32> to vector<8x16xf32>
    %40 = arith.truncf %38 : vector<8x8xf32> to vector<8x8xbf16>
    %41 = arith.truncf %39 : vector<8x16xf32> to vector<8x16xbf16>
    %cst_20 = arith.constant dense<0.000000e+00> : vector<8x16xf32>
    %42 = tpu.matmul %40, %41, %cst_20 {dimension_numbers = #tpu.dot_dimension_numbers<[1], [0], [0], [1], [0, 0, 1, 1], [], []>} : vector<8x8xbf16>, vector<8x16xbf16>, vector<8x16xf32> -> vector<8x16xf32>
    %cst_21 = arith.constant dense<0xFF800000> : vector<8xf32>
    %43 = vector.multi_reduction <maximumf>, %42, %cst_21 [1] : vector<8x16xf32> to vector<8xf32>
    %44 = vector.shape_cast %43 : vector<8xf32> to vector<8x1xf32>
    %45 = vector.broadcast %44 : vector<8x1xf32> to vector<8x16xf32>
    %46 = arith.subf %42, %45 : vector<8x16xf32>
    %47 = math.exp %46 : vector<8x16xf32>
    %cst_22 = arith.constant dense<0.000000e+00> : vector<8xf32>
    %48 = vector.multi_reduction <add>, %47, %cst_22 [1] : vector<8x16xf32> to vector<8xf32>
    %49 = vector.shape_cast %48 : vector<8xf32> to vector<8x1xf32>
    %50 = tpu.reciprocal %49 {approx = true} : vector<8x1xf32> -> vector<8x1xf32>
    %51 = vector.broadcast %50 : vector<8x1xf32> to vector<8x16xf32>
    %52 = arith.mulf %47, %51 : vector<8x16xf32>
    %53 = vector.extract_strided_slice %3 {offsets = [0, 8], sizes = [16, 8], strides = [1, 1]} : vector<16x32xf32> to vector<16x8xf32>
    %54 = arith.truncf %52 : vector<8x16xf32> to vector<8x16xbf16>
    %55 = arith.truncf %53 : vector<16x8xf32> to vector<16x8xbf16>
    %cst_23 = arith.constant dense<0.000000e+00> : vector<8x8xf32>
    %56 = tpu.matmul %54, %55, %cst_23 {dimension_numbers = #tpu.dot_dimension_numbers<[1], [0], [0], [1], [0, 0, 1, 1], [], []>} : vector<8x16xbf16>, vector<16x8xbf16>, vector<8x8xf32> -> vector<8x8xf32>
    %c8 = arith.constant 8 : index
    %c0_24 = arith.constant 0 : index
    %57 = vector.load %arg7[%c8, %c0_24] : memref<32x32xf32, #tpu.memory_space<vmem>>, vector<8x32xf32>
    %58 = arith.truncf %56 : vector<8x8xf32> to vector<8x8xbf16>
    %59 = arith.truncf %57 : vector<8x32xf32> to vector<8x32xbf16>
    %cst_25 = arith.constant dense<0.000000e+00> : vector<8x32xf32>
    %60 = tpu.matmul %58, %59, %cst_25 {dimension_numbers = #tpu.dot_dimension_numbers<[1], [0], [0], [1], [0, 0, 1, 1], [], []>} : vector<8x8xbf16>, vector<8x32xbf16>, vector<8x32xf32> -> vector<8x32xf32>
    %61 = arith.addf %37, %60 : vector<8x32xf32>
    %62 = vector.extract_strided_slice %12 {offsets = [0, 16], sizes = [8, 8], strides = [1, 1]} : vector<8x32xf32> to vector<8x8xf32>
    %63 = vector.extract_strided_slice %2 {offsets = [16, 0], sizes = [8, 16], strides = [1, 1]} : vector<32x16xf32> to vector<8x16xf32>
    %64 = arith.truncf %62 : vector<8x8xf32> to vector<8x8xbf16>
    %65 = arith.truncf %63 : vector<8x16xf32> to vector<8x16xbf16>
    %cst_26 = arith.constant dense<0.000000e+00> : vector<8x16xf32>
    %66 = tpu.matmul %64, %65, %cst_26 {dimension_numbers = #tpu.dot_dimension_numbers<[1], [0], [0], [1], [0, 0, 1, 1], [], []>} : vector<8x8xbf16>, vector<8x16xbf16>, vector<8x16xf32> -> vector<8x16xf32>
    %cst_27 = arith.constant dense<0xFF800000> : vector<8xf32>
    %67 = vector.multi_reduction <maximumf>, %66, %cst_27 [1] : vector<8x16xf32> to vector<8xf32>
    %68 = vector.shape_cast %67 : vector<8xf32> to vector<8x1xf32>
    %69 = vector.broadcast %68 : vector<8x1xf32> to vector<8x16xf32>
    %70 = arith.subf %66, %69 : vector<8x16xf32>
    %71 = math.exp %70 : vector<8x16xf32>
    %cst_28 = arith.constant dense<0.000000e+00> : vector<8xf32>
    %72 = vector.multi_reduction <add>, %71, %cst_28 [1] : vector<8x16xf32> to vector<8xf32>
    %73 = vector.shape_cast %72 : vector<8xf32> to vector<8x1xf32>
    %74 = tpu.reciprocal %73 {approx = true} : vector<8x1xf32> -> vector<8x1xf32>
    %75 = vector.broadcast %74 : vector<8x1xf32> to vector<8x16xf32>
    %76 = arith.mulf %71, %75 : vector<8x16xf32>
    %77 = vector.extract_strided_slice %3 {offsets = [0, 16], sizes = [16, 8], strides = [1, 1]} : vector<16x32xf32> to vector<16x8xf32>
    %78 = arith.truncf %76 : vector<8x16xf32> to vector<8x16xbf16>
    %79 = arith.truncf %77 : vector<16x8xf32> to vector<16x8xbf16>
    %cst_29 = arith.constant dense<0.000000e+00> : vector<8x8xf32>
    %80 = tpu.matmul %78, %79, %cst_29 {dimension_numbers = #tpu.dot_dimension_numbers<[1], [0], [0], [1], [0, 0, 1, 1], [], []>} : vector<8x16xbf16>, vector<16x8xbf16>, vector<8x8xf32> -> vector<8x8xf32>
    %c16 = arith.constant 16 : index
    %c0_30 = arith.constant 0 : index
    %81 = vector.load %arg7[%c16, %c0_30] : memref<32x32xf32, #tpu.memory_space<vmem>>, vector<8x32xf32>
    %82 = arith.truncf %80 : vector<8x8xf32> to vector<8x8xbf16>
    %83 = arith.truncf %81 : vector<8x32xf32> to vector<8x32xbf16>
    %cst_31 = arith.constant dense<0.000000e+00> : vector<8x32xf32>
    %84 = tpu.matmul %82, %83, %cst_31 {dimension_numbers = #tpu.dot_dimension_numbers<[1], [0], [0], [1], [0, 0, 1, 1], [], []>} : vector<8x8xbf16>, vector<8x32xbf16>, vector<8x32xf32> -> vector<8x32xf32>
    %85 = arith.addf %61, %84 : vector<8x32xf32>
    %86 = vector.extract_strided_slice %12 {offsets = [0, 24], sizes = [8, 8], strides = [1, 1]} : vector<8x32xf32> to vector<8x8xf32>
    %87 = vector.extract_strided_slice %2 {offsets = [24, 0], sizes = [8, 16], strides = [1, 1]} : vector<32x16xf32> to vector<8x16xf32>
    %88 = arith.truncf %86 : vector<8x8xf32> to vector<8x8xbf16>
    %89 = arith.truncf %87 : vector<8x16xf32> to vector<8x16xbf16>
    %cst_32 = arith.constant dense<0.000000e+00> : vector<8x16xf32>
    %90 = tpu.matmul %88, %89, %cst_32 {dimension_numbers = #tpu.dot_dimension_numbers<[1], [0], [0], [1], [0, 0, 1, 1], [], []>} : vector<8x8xbf16>, vector<8x16xbf16>, vector<8x16xf32> -> vector<8x16xf32>
    %cst_33 = arith.constant dense<0xFF800000> : vector<8xf32>
    %91 = vector.multi_reduction <maximumf>, %90, %cst_33 [1] : vector<8x16xf32> to vector<8xf32>
    %92 = vector.shape_cast %91 : vector<8xf32> to vector<8x1xf32>
    %93 = vector.broadcast %92 : vector<8x1xf32> to vector<8x16xf32>
    %94 = arith.subf %90, %93 : vector<8x16xf32>
    %95 = math.exp %94 : vector<8x16xf32>
    %cst_34 = arith.constant dense<0.000000e+00> : vector<8xf32>
    %96 = vector.multi_reduction <add>, %95, %cst_34 [1] : vector<8x16xf32> to vector<8xf32>
    %97 = vector.shape_cast %96 : vector<8xf32> to vector<8x1xf32>
    %98 = tpu.reciprocal %97 {approx = true} : vector<8x1xf32> -> vector<8x1xf32>
    %99 = vector.broadcast %98 : vector<8x1xf32> to vector<8x16xf32>
    %100 = arith.mulf %95, %99 : vector<8x16xf32>
    %101 = vector.extract_strided_slice %3 {offsets = [0, 24], sizes = [16, 8], strides = [1, 1]} : vector<16x32xf32> to vector<16x8xf32>
    %102 = arith.truncf %100 : vector<8x16xf32> to vector<8x16xbf16>
    %103 = arith.truncf %101 : vector<16x8xf32> to vector<16x8xbf16>
    %cst_35 = arith.constant dense<0.000000e+00> : vector<8x8xf32>
    %104 = tpu.matmul %102, %103, %cst_35 {dimension_numbers = #tpu.dot_dimension_numbers<[1], [0], [0], [1], [0, 0, 1, 1], [], []>} : vector<8x16xbf16>, vector<16x8xbf16>, vector<8x8xf32> -> vector<8x8xf32>
    %c24 = arith.constant 24 : index
    %c0_36 = arith.constant 0 : index
    %105 = vector.load %arg7[%c24, %c0_36] : memref<32x32xf32, #tpu.memory_space<vmem>>, vector<8x32xf32>
    %106 = arith.truncf %104 : vector<8x8xf32> to vector<8x8xbf16>
    %107 = arith.truncf %105 : vector<8x32xf32> to vector<8x32xbf16>
    %cst_37 = arith.constant dense<0.000000e+00> : vector<8x32xf32>
    %108 = tpu.matmul %106, %107, %cst_37 {dimension_numbers = #tpu.dot_dimension_numbers<[1], [0], [0], [1], [0, 0, 1, 1], [], []>} : vector<8x8xbf16>, vector<8x32xbf16>, vector<8x32xf32> -> vector<8x32xf32>
    %109 = arith.addf %85, %108 : vector<8x32xf32>
    %110 = arith.addf %0, %109 : vector<8x32xf32>
    %c0_38 = arith.constant 0 : index
    %c0_39 = arith.constant 0 : index
    %111 = vector.load %arg8[%c0_38, %c0_39] : memref<1x32xf32, #tpu.memory_space<vmem>>, vector<1x32xf32>
    %112 = vector.broadcast %111 : vector<1x32xf32> to vector<8x32xf32>
    %113 = arith.addf %110, %112 : vector<8x32xf32>
    %c0_40 = arith.constant 0 : index
    %c0_41 = arith.constant 0 : index
    %114 = vector.load %arg19[%c0_40, %c0_41] : memref<8x32xf32, #tpu.memory_space<vmem>>, vector<8x32xf32>
    tpu.vector_store %arg19[%c0_40, %c0_41], %113 {strides = array<i32>} : memref<8x32xf32, #tpu.memory_space<vmem>>, vector<8x32xf32>,
    %c0_42 = arith.constant 0 : index
    %c0_43 = arith.constant 0 : index
    %115 = vector.load %arg9[%c0_42, %c0_43] : memref<1x32xf32, #tpu.memory_space<vmem>>, vector<1x32xf32>
    %c0_44 = arith.constant 0 : index
    %c0_45 = arith.constant 0 : index
    %116 = vector.load %arg10[%c0_44, %c0_45] : memref<1x32xf32, #tpu.memory_space<vmem>>, vector<1x32xf32>
    %cst_46 = arith.constant dense<0.000000e+00> : vector<8xf32>
    %117 = vector.multi_reduction <add>, %113, %cst_46 [1] : vector<8x32xf32> to vector<8xf32>
    %118 = vector.shape_cast %117 : vector<8xf32> to vector<8x1xf32>
    %cst_47 = arith.constant 3.200000e+01 : f32
    %119 = vector.broadcast %cst_47 : f32 to vector<8x1xf32>
    %120 = arith.divf %118, %119 : vector<8x1xf32>
    %121 = vector.broadcast %120 : vector<8x1xf32> to vector<8x32xf32>
    %122 = arith.subf %113, %121 : vector<8x32xf32>
    %123 = arith.mulf %122, %122 : vector<8x32xf32>
    %cst_48 = arith.constant dense<0.000000e+00> : vector<8xf32>
    %124 = vector.multi_reduction <add>, %123, %cst_48 [1] : vector<8x32xf32> to vector<8xf32>
    %125 = vector.shape_cast %124 : vector<8xf32> to vector<8x1xf32>
    %cst_49 = arith.constant 3.200000e+01 : f32
    %126 = vector.broadcast %cst_49 : f32 to vector<8x1xf32>
    %127 = arith.divf %125, %126 : vector<8x1xf32>
    %128 = vector.broadcast %120 : vector<8x1xf32> to vector<8x32xf32>
    %129 = arith.subf %113, %128 : vector<8x32xf32>
    %cst_50 = arith.constant 9.99999974E-6 : f32
    %130 = vector.broadcast %cst_50 : f32 to vector<8x1xf32>
    %131 = arith.addf %127, %130 : vector<8x1xf32>
    %132 = math.rsqrt %131 : vector<8x1xf32>
    %133 = vector.broadcast %132 : vector<8x1xf32> to vector<8x32xf32>
    %134 = arith.mulf %129, %133 : vector<8x32xf32>
    %135 = vector.broadcast %115 : vector<1x32xf32> to vector<8x32xf32>
    %136 = arith.mulf %134, %135 : vector<8x32xf32>
    %137 = vector.broadcast %116 : vector<1x32xf32> to vector<8x32xf32>
    %138 = arith.addf %136, %137 : vector<8x32xf32>
    %c0_51 = arith.constant 0 : index
    %c0_52 = arith.constant 0 : index
    %139 = vector.load %arg11[%c0_51, %c0_52] : memref<32x128xf32, #tpu.memory_space<vmem>>, vector<32x128xf32>
    %140 = arith.truncf %138 : vector<8x32xf32> to vector<8x32xbf16>
    %141 = arith.truncf %139 : vector<32x128xf32> to vector<32x128xbf16>
    %cst_53 = arith.constant dense<0.000000e+00> : vector<8x128xf32>
    %142 = tpu.matmul %140, %141, %cst_53 {dimension_numbers = #tpu.dot_dimension_numbers<[1], [0], [0], [1], [0, 0, 1, 1], [], []>} : vector<8x32xbf16>, vector<32x128xbf16>, vector<8x128xf32> -> vector<8x128xf32>
    %c0_54 = arith.constant 0 : index
    %c0_55 = arith.constant 0 : index
    %143 = vector.load %arg12[%c0_54, %c0_55] : memref<1x128xf32, #tpu.memory_space<vmem>>, vector<1x128xf32>
    %144 = vector.broadcast %143 : vector<1x128xf32> to vector<8x128xf32>
    %145 = arith.addf %142, %144 : vector<8x128xf32>
    %cst_56 = arith.constant 0.176776692 : f32
    %146 = vector.broadcast %cst_56 : f32 to vector<8x128xf32>
    %147 = arith.mulf %145, %146 : vector<8x128xf32>
    %c0_57 = arith.constant 0 : index
    %c0_58 = arith.constant 0 : index
    %148 = vector.load %arg20[%c0_57, %c0_58] : memref<8x128xf32, #tpu.memory_space<vmem>>, vector<8x128xf32>
    tpu.vector_store %arg20[%c0_57, %c0_58], %147 {strides = array<i32>} : memref<8x128xf32, #tpu.memory_space<vmem>>, vector<8x128xf32>,
    %c0_59 = arith.constant 0 : index
    %c0_60 = arith.constant 0 : index
    %149 = vector.load %arg13[%c0_59, %c0_60] : memref<32x128xf32, #tpu.memory_space<vmem>>, vector<32x128xf32>
    %150 = arith.truncf %138 : vector<8x32xf32> to vector<8x32xbf16>
    %151 = arith.truncf %149 : vector<32x128xf32> to vector<32x128xbf16>
    %cst_61 = arith.constant dense<0.000000e+00> : vector<8x128xf32>
    %152 = tpu.matmul %150, %151, %cst_61 {dimension_numbers = #tpu.dot_dimension_numbers<[1], [0], [0], [1], [0, 0, 1, 1], [], []>} : vector<8x32xbf16>, vector<32x128xbf16>, vector<8x128xf32> -> vector<8x128xf32>
    %c0_62 = arith.constant 0 : index
    %c0_63 = arith.constant 0 : index
    %153 = vector.load %arg14[%c0_62, %c0_63] : memref<1x128xf32, #tpu.memory_space<vmem>>, vector<1x128xf32>
    %154 = vector.broadcast %153 : vector<1x128xf32> to vector<8x128xf32>
    %155 = arith.addf %152, %154 : vector<8x128xf32>
    %c0_64 = arith.constant 0 : index
    %c0_65 = arith.constant 0 : index
    %156 = vector.load %arg21[%c0_64, %c0_65] : memref<8x128xf32, #tpu.memory_space<vmem>>, vector<8x128xf32>
    tpu.vector_store %arg21[%c0_64, %c0_65], %155 {strides = array<i32>} : memref<8x128xf32, #tpu.memory_space<vmem>>, vector<8x128xf32>,
    %c0_66 = arith.constant 0 : index
    %c0_67 = arith.constant 0 : index
    %157 = vector.load %arg15[%c0_66, %c0_67] : memref<32x128xf32, #tpu.memory_space<vmem>>, vector<32x128xf32>
    %158 = arith.truncf %138 : vector<8x32xf32> to vector<8x32xbf16>
    %159 = arith.truncf %157 : vector<32x128xf32> to vector<32x128xbf16>
    %cst_68 = arith.constant dense<0.000000e+00> : vector<8x128xf32>
    %160 = tpu.matmul %158, %159, %cst_68 {dimension_numbers = #tpu.dot_dimension_numbers<[1], [0], [0], [1], [0, 0, 1, 1], [], []>} : vector<8x32xbf16>, vector<32x128xbf16>, vector<8x128xf32> -> vector<8x128xf32>
    %c0_69 = arith.constant 0 : index
    %c0_70 = arith.constant 0 : index
    %161 = vector.load %arg16[%c0_69, %c0_70] : memref<1x128xf32, #tpu.memory_space<vmem>>, vector<1x128xf32>
    %162 = vector.broadcast %161 : vector<1x128xf32> to vector<8x128xf32>
    %163 = arith.addf %160, %162 : vector<8x128xf32>
    %c0_71 = arith.constant 0 : index
    %c0_72 = arith.constant 0 : index
    %164 = vector.load %arg22[%c0_71, %c0_72] : memref<8x128xf32, #tpu.memory_space<vmem>>, vector<8x128xf32>
    tpu.vector_store %arg22[%c0_71, %c0_72], %163 {strides = array<i32>} : memref<8x128xf32, #tpu.memory_space<vmem>>, vector<8x128xf32>,
    %c0_73 = arith.constant 0 : index
    %c0_74 = arith.constant 0 : index
    %165 = vector.load %arg17[%c0_73, %c0_74] : memref<32x32xf32, #tpu.memory_space<vmem>>, vector<32x32xf32>
    %166 = arith.truncf %138 : vector<8x32xf32> to vector<8x32xbf16>
    %167 = arith.truncf %165 : vector<32x32xf32> to vector<32x32xbf16>
    %cst_75 = arith.constant dense<0.000000e+00> : vector<8x32xf32>
    %168 = tpu.matmul %166, %167, %cst_75 {dimension_numbers = #tpu.dot_dimension_numbers<[1], [0], [0], [1], [0, 0, 1, 1], [], []>} : vector<8x32xbf16>, vector<32x32xbf16>, vector<8x32xf32> -> vector<8x32xf32>
    %c0_76 = arith.constant 0 : index
    %c0_77 = arith.constant 0 : index
    %169 = vector.load %arg18[%c0_76, %c0_77] : memref<1x32xf32, #tpu.memory_space<vmem>>, vector<1x32xf32>
    %170 = vector.broadcast %169 : vector<1x32xf32> to vector<8x32xf32>
    %171 = arith.addf %168, %170 : vector<8x32xf32>
    %c0_78 = arith.constant 0 : index
    %c0_79 = arith.constant 0 : index
    %172 = vector.load %arg23[%c0_78, %c0_79] : memref<8x32xf32, #tpu.memory_space<vmem>>, vector<8x32xf32>
    tpu.vector_store %arg23[%c0_78, %c0_79], %171 {strides = array<i32>} : memref<8x32xf32, #tpu.memory_space<vmem>>, vector<8x32xf32>,
    return
  }
  func.func @transform_0(%arg0: i32) -> (i32, i32) {
    %c0_i32 = arith.constant 0 : i32
    %c0_i32_0 = arith.constant 0 : i32
    return %arg0, %c0_i32 : i32, i32
  }
  func.func @transform_1(%arg0: i32) -> (i32, i32) {
    %c0_i32 = arith.constant 0 : i32
    %c0_i32_0 = arith.constant 0 : i32
    return %arg0, %c0_i32 : i32, i32
  }
  func.func @transform_2(%arg0: i32) -> (i32, i32) {
    %c0_i32 = arith.constant 0 : i32
    %c0_i32_0 = arith.constant 0 : i32
    %c0_i32_1 = arith.constant 0 : i32
    return %c0_i32, %c0_i32_0 : i32, i32
  }
  func.func @transform_3(%arg0: i32) -> (i32, i32) {
    %c0_i32 = arith.constant 0 : i32
    %c0_i32_0 = arith.constant 0 : i32
    %c0_i32_1 = arith.constant 0 : i32
    return %c0_i32, %c0_i32_0 : i32, i32
  }
  func.func @transform_4(%arg0: i32) -> (i32, i32) {
    %c0_i32 = arith.constant 0 : i32
    %c0_i32_0 = arith.constant 0 : i32
    %c0_i32_1 = arith.constant 0 : i32
    return %c0_i32, %c0_i32_0 : i32, i32
  }
  func.func @transform_5(%arg0: i32) -> (i32, i32) {
    %c0_i32 = arith.constant 0 : i32
    %c0_i32_0 = arith.constant 0 : i32
    %c0_i32_1 = arith.constant 0 : i32
    return %c0_i32, %c0_i32_0 : i32, i32
  }
  func.func @transform_6(%arg0: i32) -> (i32, i32) {
    %c0_i32 = arith.constant 0 : i32
    %c0_i32_0 = arith.constant 0 : i32
    %c0_i32_1 = arith.constant 0 : i32
    return %c0_i32, %c0_i32_0 : i32, i32
  }
  func.func @transform_7(%arg0: i32) -> (i32, i32) {
    %c0_i32 = arith.constant 0 : i32
    %c0_i32_0 = arith.constant 0 : i32
    %c0_i32_1 = arith.constant 0 : i32
    return %c0_i32, %c0_i32_0 : i32, i32
  }
  func.func @transform_8(%arg0: i32) -> (i32, i32) {
    %c0_i32 = arith.constant 0 : i32
    %c0_i32_0 = arith.constant 0 : i32
    %c0_i32_1 = arith.constant 0 : i32
    return %c0_i32, %c0_i32_0 : i32, i32
  }
  func.func @transform_9(%arg0: i32) -> (i32, i32) {
    %c0_i32 = arith.constant 0 : i32
    %c0_i32_0 = arith.constant 0 : i32
    %c0_i32_1 = arith.constant 0 : i32
    return %c0_i32, %c0_i32_0 : i32, i32
  }
  func.func @transform_10(%arg0: i32) -> (i32, i32) {
    %c0_i32 = arith.constant 0 : i32
    %c0_i32_0 = arith.constant 0 : i32
    %c0_i32_1 = arith.constant 0 : i32
    return %c0_i32, %c0_i32_0 : i32, i32
  }
  func.func @transform_11(%arg0: i32) -> (i32, i32) {
    %c0_i32 = arith.constant 0 : i32
    %c0_i32_0 = arith.constant 0 : i32
    %c0_i32_1 = arith.constant 0 : i32
    return %c0_i32, %c0_i32_0 : i32, i32
  }
  func.func @transform_12(%arg0: i32) -> (i32, i32) {
    %c0_i32 = arith.constant 0 : i32
    %c0_i32_0 = arith.constant 0 : i32
    %c0_i32_1 = arith.constant 0 : i32
    return %c0_i32, %c0_i32_0 : i32, i32
  }
  func.func @transform_13(%arg0: i32) -> (i32, i32) {
    %c0_i32 = arith.constant 0 : i32
    %c0_i32_0 = arith.constant 0 : i32
    %c0_i32_1 = arith.constant 0 : i32
    return %c0_i32, %c0_i32_0 : i32, i32
  }
  func.func @transform_14(%arg0: i32) -> (i32, i32) {
    %c0_i32 = arith.constant 0 : i32
    %c0_i32_0 = arith.constant 0 : i32
    %c0_i32_1 = arith.constant 0 : i32
    return %c0_i32, %c0_i32_0 : i32, i32
  }
  func.func @transform_15(%arg0: i32) -> (i32, i32) {
    %c0_i32 = arith.constant 0 : i32
    %c0_i32_0 = arith.constant 0 : i32
    %c0_i32_1 = arith.constant 0 : i32
    return %c0_i32, %c0_i32_0 : i32, i32
  }
  func.func @transform_16(%arg0: i32) -> (i32, i32) {
    %c0_i32 = arith.constant 0 : i32
    %c0_i32_0 = arith.constant 0 : i32
    %c0_i32_1 = arith.constant 0 : i32
    return %c0_i32, %c0_i32_0 : i32, i32
  }
  func.func @transform_17(%arg0: i32) -> (i32, i32) {
    %c0_i32 = arith.constant 0 : i32
    %c0_i32_0 = arith.constant 0 : i32
    %c0_i32_1 = arith.constant 0 : i32
    return %c0_i32, %c0_i32_0 : i32, i32
  }
  func.func @transform_18(%arg0: i32) -> (i32, i32) {
    %c0_i32 = arith.constant 0 : i32
    %c0_i32_0 = arith.constant 0 : i32
    return %arg0, %c0_i32 : i32, i32
  }
  func.func @transform_19(%arg0: i32) -> (i32, i32) {
    %c0_i32 = arith.constant 0 : i32
    %c0_i32_0 = arith.constant 0 : i32
    return %arg0, %c0_i32 : i32, i32
  }
  func.func @transform_20(%arg0: i32) -> (i32, i32) {
    %c0_i32 = arith.constant 0 : i32
    %c0_i32_0 = arith.constant 0 : i32
    return %arg0, %c0_i32 : i32, i32
  }
  func.func @transform_21(%arg0: i32) -> (i32, i32) {
    %c0_i32 = arith.constant 0 : i32
    %c0_i32_0 = arith.constant 0 : i32
    return %arg0, %c0_i32 : i32, i32
  }
  func.func @transform_22(%arg0: i32) -> (i32, i32) {
    %c0_i32 = arith.constant 0 : i32
    %c0_i32_0 = arith.constant 0 : i32
    return %arg0, %c0_i32 : i32, i32
  }
}

</mosaic_0001>

<llo_original>
// kernel: tpu_custom_call.1
$region0: #{tpu_custom_call.1}
  #allocation0 [shape = 'u32[]', space=smem, size = 0x4, offset = 0x4, fixed_abs, tag = 'smem constant byte address 0x4 - core index']
  #allocation1 [shape = 'u32[144,128]{1,0:T(1,128)}', space=vmem, size = 0x12000, scoped, tag = 'internal scratch']
  %s0 = inlined_call_operand.hbm [shape: f32[16,32], index: 0, kind: input, shape index: {}]
  %s1 = inlined_call_operand.hbm [shape: f32[16,32], index: 1, kind: input, shape index: {}]
  %s2 = inlined_call_operand.vmem [shape: f32[32,16], index: 2, kind: input, shape index: {}]
  %s3 = inlined_call_operand.hbm [shape: f32[16,32], index: 3, kind: input, shape index: {}]
  %s4 = inlined_call_operand.vmem [shape: f32[32,32], index: 4, kind: input, shape index: {}]
  %s5 = inlined_call_operand.hbm [shape: f32[1,32], index: 5, kind: input, shape index: {}]
  %s6 = inlined_call_operand.hbm [shape: f32[32,32], index: 6, kind: input, shape index: {}]
  %s7 = inlined_call_operand.hbm [shape: f32[1,32], index: 7, kind: input, shape index: {}]
  %s8 = inlined_call_operand.hbm [shape: f32[1,32], index: 8, kind: input, shape index: {}]
  %s9 = inlined_call_operand.hbm [shape: f32[1,32], index: 9, kind: input, shape index: {}]
  %s10 = inlined_call_operand.vmem [shape: f32[32,128], index: 10, kind: input, shape index: {}]
  %s11 = inlined_call_operand.vmem [shape: f32[1,128], index: 11, kind: input, shape index: {}]
  %s12 = inlined_call_operand.hbm [shape: f32[32,128], index: 12, kind: input, shape index: {}]
  %s13 = inlined_call_operand.vmem [shape: f32[1,128], index: 13, kind: input, shape index: {}]
  %s14 = inlined_call_operand.hbm [shape: f32[32,128], index: 14, kind: input, shape index: {}]
  %s15 = inlined_call_operand.vmem [shape: f32[1,128], index: 15, kind: input, shape index: {}]
  %s16 = inlined_call_operand.hbm [shape: f32[32,32], index: 16, kind: input, shape index: {}]
  %s17 = inlined_call_operand.vmem [shape: f32[1,32], index: 17, kind: input, shape index: {}]
  %s18 = inlined_call_operand.hbm [shape: f32[16,32], index: 18, kind: output, shape index: {0}]
  %s19 = inlined_call_operand.hbm [shape: f32[16,128], index: 19, kind: output, shape index: {1}]
  %s20 = inlined_call_operand.hbm [shape: f32[16,128], index: 20, kind: output, shape index: {2}]
  %s21 = inlined_call_operand.hbm [shape: f32[16,128], index: 21, kind: output, shape index: {3}]
  %s22 = inlined_call_operand.hbm [shape: f32[16,32], index: 22, kind: output, shape index: {4}]
  %23 = xla_tuple %s18, %s19, %s20, %s21, %s22
  %s24 = sld [smem:[#allocation0]]
  $region181: #{tpu_custom_call.1} parent=0
    _
  %s26 = ssub.s32 1, %s24
  %s27 = scalar_select 0, %s26, %s24
  $region1: #{tpu_custom_call.1} parent=0
    #allocation2 [shape = 'u8[8192]{0}', space=vmem, size = 0x2000, scoped, tag = 'input window, operand 0']
    #allocation3 [shape = 's32[2]{0}', space=sflag, size = 0x8, scoped, tag = 'scoped memory for tpu_custom_call.1']
    #allocation4 [shape = 's32[2]{0}', space=sflag, size = 0x8, scoped, tag = 'scoped memory for tpu_custom_call.1']
    #allocation5 [shape = 'u8[8192]{0}', space=vmem, size = 0x2000, scoped, tag = 'input window, operand 1']
    #allocation6 [shape = 's32[2]{0}', space=sflag, size = 0x8, scoped, tag = 'scoped memory for tpu_custom_call.1']
    #allocation7 [shape = 'u8[8192]{0}', space=vmem, size = 0x2000, scoped, tag = 'input window, operand 3, single buffered']
    #allocation8 [shape = 'u8[512]{0}', space=vmem, size = 0x400, scoped, tag = 'input window, operand 5, single buffered']
    #allocation9 [shape = 's32[1]{0}', space=sflag, size = 0x4, scoped, tag = 'scoped memory for tpu_custom_call.1']
    #allocation10 [shape = 'u8[16384]{0}', space=vmem, size = 0x4000, scoped, tag = 'input window, operand 6, single buffered']
    #allocation11 [shape = 'u8[512]{0}', space=vmem, size = 0x400, scoped, tag = 'input window, operand 7, single buffered']
    #allocation12 [shape = 's32[1]{0}', space=sflag, size = 0x4, scoped, tag = 'scoped memory for tpu_custom_call.1']
    #allocation13 [shape = 'u8[512]{0}', space=vmem, size = 0x400, scoped, tag = 'input window, operand 8, single buffered']
    #allocation14 [shape = 'u8[512]{0}', space=vmem, size = 0x400, scoped, tag = 'input window, operand 9, single buffered']
    #allocation15 [shape = 's32[1]{0}', space=sflag, size = 0x4, scoped, tag = 'scoped memory for tpu_custom_call.1']
    #allocation16 [shape = 'u8[16384]{0}', space=vmem, size = 0x4000, scoped, tag = 'input window, operand 12, single buffered']
    #allocation17 [shape = 'u8[16384]{0}', space=vmem, size = 0x4000, scoped, tag = 'input window, operand 14, single buffered']
    #allocation18 [shape = 's32[1]{0}', space=sflag, size = 0x4, scoped, tag = 'scoped memory for tpu_custom_call.1']
    #allocation19 [shape = 'u8[16384]{0}', space=vmem, size = 0x4000, scoped, tag = 'input window, operand 16, single buffered']
    #allocation20 [shape = 'u8[8192]{0}', space=vmem, size = 0x2000, scoped, tag = 'output window, operand 0']
    #allocation21 [shape = 'u8[8192]{0}', space=vmem, size = 0x2000, scoped, tag = 'output window, operand 1']
    #allocation22 [shape = 's32[2]{0}', space=sflag, size = 0x8, scoped, tag = 'scoped memory for tpu_custom_call.1']
    #allocation23 [shape = 'u8[8192]{0}', space=vmem, size = 0x2000, scoped, tag = 'output window, operand 2']
    #allocation24 [shape = 'u8[8192]{0}', space=vmem, size = 0x2000, scoped, tag = 'output window, operand 3']
    #allocation25 [shape = 's32[2]{0}', space=sflag, size = 0x8, scoped, tag = 'scoped memory for tpu_custom_call.1']
    #allocation26 [shape = 'u8[8192]{0}', space=vmem, size = 0x2000, scoped, tag = 'output window, operand 4']
    %28 = vsyncpa [#allocation3], 0
    %s29 = scalar_lea.sflag [#allocation3], 1
    %30 = vsyncpa %s29, 0
    %31 = vsyncpa [#allocation6], 0
    %s32 = scalar_lea.sflag [#allocation6], 1
    %33 = vsyncpa %s32, 0
    %34 = vsyncpa [#allocation9], 0
    %35 = vsyncpa [#allocation12], 0
    %36 = vsyncpa [#allocation15], 0
    %37 = vsyncpa [#allocation18], 0
    %38 = vsyncpa [#allocation4], 0
    %s39 = scalar_lea.sflag [#allocation4], 1
    %40 = vsyncpa %s39, 0
    %41 = vsyncpa [#allocation22], 0
    %s42 = scalar_lea.sflag [#allocation22], 1
    %43 = vsyncpa %s42, 0
    %44 = vsyncpa [#allocation25], 0
    %s45 = scalar_lea.sflag [#allocation25], 1
    %46 = vsyncpa %s45, 0
    loop: start=0, step=1, limit=4
    $region2: #{tpu_custom_call.1} parent=1 // loop_pre_header
      _
    $region3: #{tpu_custom_call.1} parent=1 // loop_header
      %s48 = sphi 0, %s52
      %p49 = scmp.ge.s32.totalorder %s48, 4
      %s58 = sphi 0, %s60
      %s61 = sphi 0, %s58
      %s62 = sphi 0, %s61
      %s78 = sphi 0, %s62
      %s84 = sphi 0, %s86
      %s87 = sphi 0, %s84
      %s88 = sphi 0, %s87
      %s104 = sphi 0, %s88
      %s108 = sphi 0, %s108
      %s110 = sphi 0, %s108
      %s111 = sphi 0, %s110
      %s125 = sphi 0, %s111
      %s129 = sphi 0, %s129
      %s131 = sphi 0, %s129
      %s132 = sphi 0, %s131
      %s146 = sphi 0, %s132
      %s150 = sphi 0, %s150
      %s152 = sphi 0, %s150
      %s153 = sphi 0, %s152
      %s167 = sphi 0, %s153
      %s171 = sphi 0, %s171
      %s173 = sphi 0, %s171
      %s174 = sphi 0, %s173
      %s188 = sphi 0, %s174
      %s192 = sphi 0, %s192
      %s194 = sphi 0, %s192
      %s195 = sphi 0, %s194
      %s209 = sphi 0, %s195
      %s213 = sphi 0, %s213
      %s215 = sphi 0, %s213
      %s216 = sphi 0, %s215
      %s230 = sphi 0, %s216
      %s234 = sphi 0, %s234
      %s236 = sphi 0, %s234
      %s237 = sphi 0, %s236
      %s251 = sphi 0, %s237
      %s255 = sphi 0, %s255
      %s257 = sphi 0, %s255
      %s258 = sphi 0, %s257
      %s272 = sphi 0, %s258
      %s276 = sphi 0, %s276
      %s278 = sphi 0, %s276
      %s279 = sphi 0, %s278
      %s293 = sphi 0, %s279
      %s297 = sphi 0, %s297
      %s299 = sphi 0, %s297
      %s300 = sphi 0, %s299
      %s314 = sphi 0, %s300
      %s318 = sphi 0, %s318
      %s320 = sphi 0, %s318
      %s321 = sphi 0, %s320
      %s335 = sphi 0, %s321
      %s339 = sphi 0, %s339
      %s341 = sphi 0, %s339
      %s342 = sphi 0, %s341
      %s356 = sphi 0, %s342
      %s360 = sphi 0, %s360
      %s362 = sphi 0, %s360
      %s363 = sphi 0, %s362
      %s377 = sphi 0, %s363
      %s381 = sphi 0, %s381
      %s383 = sphi 0, %s381
      %s384 = sphi 0, %s383
      %s398 = sphi 0, %s384
      %s402 = sphi 0, %s402
      %s404 = sphi 0, %s402
      %s405 = sphi 0, %s404
      %s419 = sphi 0, %s405
      %s423 = sphi 0, %s423
      %s425 = sphi 0, %s423
      %s426 = sphi 0, %s425
      %s440 = sphi 0, %s426
      %s446 = sphi 0, %s448
      %s449 = sphi 0, %s446
      %s450 = sphi 0, %s449
      %s466 = sphi 0, %s450
      %s472 = sphi 0, %s474
      %s475 = sphi 0, %s472
      %s476 = sphi 0, %s475
      %s492 = sphi 0, %s476
      %s498 = sphi 0, %s500
      %s501 = sphi 0, %s498
      %s502 = sphi 0, %s501
      %s518 = sphi 0, %s502
      %s524 = sphi 0, %s526
      %s527 = sphi 0, %s524
      %s528 = sphi 0, %s527
      %s544 = sphi 0, %s528
      %s550 = sphi 0, %s552
      %s553 = sphi 0, %s550
      %s554 = sphi 0, %s553
      %s570 = sphi 0, %s554
    $region4: #{tpu_custom_call.1} parent=1 // loop_header_branch
      %51 = sbr.rel (%p49) target = $region8
    $region5: #{tpu_custom_call.1} parent=1 // loop_body
      %s53 = ssub.s32 %s48, 1
      %s54 = ssub.s32 %s48, 2
      %s55 = sadd.s32 %s48, 1
      %s56 = ssub.s32 %s48, %s55
      %p57 = scmp.eq.s32.totalorder %s56, 0
      %s59 = sadd.s32 %s58, 1
      %s60 = scalar_select %p57, %s58, %s59
      %p63 = pneg %p57
      %p64 = scmp.eq.s32.totalorder %s48, 1
      %p65 = por %p63, %p64
      %p66 = scmp.ne.s32.totalorder %s58, %s61
      %p67 = scmp.eq.s32.totalorder %s48, 0
      %p68 = por %p66, %p67
      %p69 = scmp.ne.s32.totalorder %s58, %s61
      %p70 = scmp.eq.s32.totalorder %s53, 1
      %p71 = por %p69, %p70
      %p72 = scmp.ne.s32.totalorder %s61, %s62
      %p73 = scmp.eq.s32.totalorder %s53, 0
      %p74 = por %p72, %p73
      %p75 = scmp.ne.s32.totalorder %s61, %s62
      %p76 = scmp.eq.s32.totalorder %s54, 1
      %p77 = por %p75, %p76
      %p79 = scmp.ne.s32.totalorder %s62, %s78
      %p80 = scmp.eq.s32.totalorder %s54, 0
      %p81 = por %p79, %p80
      %s82 = ssub.s32 %s48, %s55
      %p83 = scmp.eq.s32.totalorder %s82, 0
      %s85 = sadd.s32 %s84, 1
      %s86 = scalar_select %p83, %s84, %s85
      %p89 = pneg %p83
      %p90 = scmp.eq.s32.totalorder %s48, 1
      %p91 = por %p89, %p90
      %p92 = scmp.ne.s32.totalorder %s84, %s87
      %p93 = scmp.eq.s32.totalorder %s48, 0
      %p94 = por %p92, %p93
      %p95 = scmp.ne.s32.totalorder %s84, %s87
      %p96 = scmp.eq.s32.totalorder %s53, 1
      %p97 = por %p95, %p96
      %p98 = scmp.ne.s32.totalorder %s87, %s88
      %p99 = scmp.eq.s32.totalorder %s53, 0
      %p100 = por %p98, %p99
      %p101 = scmp.ne.s32.totalorder %s87, %s88
      %p102 = scmp.eq.s32.totalorder %s54, 1
      %p103 = por %p101, %p102
      %p105 = scmp.ne.s32.totalorder %s88, %s104
      %p106 = scmp.eq.s32.totalorder %s54, 0
      %p107 = por %p105, %p106
      %s109 = sadd.s32 %s108, 1
      %p112 = scmp.eq.s32.totalorder %s48, 1
      %p113 = scmp.ne.s32.totalorder %s108, %s110
      %p114 = scmp.eq.s32.totalorder %s48, 0
      %p115 = por %p113, %p114
      %p116 = scmp.ne.s32.totalorder %s108, %s110
      %p117 = scmp.eq.s32.totalorder %s53, 1
      %p118 = por %p116, %p117
      %p119 = scmp.ne.s32.totalorder %s110, %s111
      %p120 = scmp.eq.s32.totalorder %s53, 0
      %p121 = por %p119, %p120
      %p122 = scmp.ne.s32.totalorder %s110, %s111
      %p123 = scmp.eq.s32.totalorder %s54, 1
      %p124 = por %p122, %p123
      %p126 = scmp.ne.s32.totalorder %s111, %s125
      %p127 = scmp.eq.s32.totalorder %s54, 0
      %p128 = por %p126, %p127
      %s130 = sadd.s32 %s129, 1
      %p133 = scmp.eq.s32.totalorder %s48, 1
      %p134 = scmp.ne.s32.totalorder %s129, %s131
      %p135 = scmp.eq.s32.totalorder %s48, 0
      %p136 = por %p134, %p135
      %p137 = scmp.ne.s32.totalorder %s129, %s131
      %p138 = scmp.eq.s32.totalorder %s53, 1
      %p139 = por %p137, %p138
      %p140 = scmp.ne.s32.totalorder %s131, %s132
      %p141 = scmp.eq.s32.totalorder %s53, 0
      %p142 = por %p140, %p141
      %p143 = scmp.ne.s32.totalorder %s131, %s132
      %p144 = scmp.eq.s32.totalorder %s54, 1
      %p145 = por %p143, %p144
      %p147 = scmp.ne.s32.totalorder %s132, %s146
      %p148 = scmp.eq.s32.totalorder %s54, 0
      %p149 = por %p147, %p148
      %s151 = sadd.s32 %s150, 1
      %p154 = scmp.eq.s32.totalorder %s48, 1
      %p155 = scmp.ne.s32.totalorder %s150, %s152
      %p156 = scmp.eq.s32.totalorder %s48, 0
      %p157 = por %p155, %p156
      %p158 = scmp.ne.s32.totalorder %s150, %s152
      %p159 = scmp.eq.s32.totalorder %s53, 1
      %p160 = por %p158, %p159
      %p161 = scmp.ne.s32.totalorder %s152, %s153
      %p162 = scmp.eq.s32.totalorder %s53, 0
      %p163 = por %p161, %p162
      %p164 = scmp.ne.s32.totalorder %s152, %s153
      %p165 = scmp.eq.s32.totalorder %s54, 1
      %p166 = por %p164, %p165
      %p168 = scmp.ne.s32.totalorder %s153, %s167
      %p169 = scmp.eq.s32.totalorder %s54, 0
      %p170 = por %p168, %p169
      %s172 = sadd.s32 %s171, 1
      %p175 = scmp.eq.s32.totalorder %s48, 1
      %p176 = scmp.ne.s32.totalorder %s171, %s173
      %p177 = scmp.eq.s32.totalorder %s48, 0
      %p178 = por %p176, %p177
      %p179 = scmp.ne.s32.totalorder %s171, %s173
      %p180 = scmp.eq.s32.totalorder %s53, 1
      %p181 = por %p179, %p180
      %p182 = scmp.ne.s32.totalorder %s173, %s174
      %p183 = scmp.eq.s32.totalorder %s53, 0
      %p184 = por %p182, %p183
      %p185 = scmp.ne.s32.totalorder %s173, %s174
      %p186 = scmp.eq.s32.totalorder %s54, 1
      %p187 = por %p185, %p186
      %p189 = scmp.ne.s32.totalorder %s174, %s188
      %p190 = scmp.eq.s32.totalorder %s54, 0
      %p191 = por %p189, %p190
      %s193 = sadd.s32 %s192, 1
      %p196 = scmp.eq.s32.totalorder %s48, 1
      %p197 = scmp.ne.s32.totalorder %s192, %s194
      %p198 = scmp.eq.s32.totalorder %s48, 0
      %p199 = por %p197, %p198
      %p200 = scmp.ne.s32.totalorder %s192, %s194
      %p201 = scmp.eq.s32.totalorder %s53, 1
      %p202 = por %p200, %p201
      %p203 = scmp.ne.s32.totalorder %s194, %s195
      %p204 = scmp.eq.s32.totalorder %s53, 0
      %p205 = por %p203, %p204
      %p206 = scmp.ne.s32.totalorder %s194, %s195
      %p207 = scmp.eq.s32.totalorder %s54, 1
      %p208 = por %p206, %p207
      %p210 = scmp.ne.s32.totalorder %s195, %s209
      %p211 = scmp.eq.s32.totalorder %s54, 0
      %p212 = por %p210, %p211
      %s214 = sadd.s32 %s213, 1
      %p217 = scmp.eq.s32.totalorder %s48, 1
      %p218 = scmp.ne.s32.totalorder %s213, %s215
      %p219 = scmp.eq.s32.totalorder %s48, 0
      %p220 = por %p218, %p219
      %p221 = scmp.ne.s32.totalorder %s213, %s215
      %p222 = scmp.eq.s32.totalorder %s53, 1
      %p223 = por %p221, %p222
      %p224 = scmp.ne.s32.totalorder %s215, %s216
      %p225 = scmp.eq.s32.totalorder %s53, 0
      %p226 = por %p224, %p225
      %p227 = scmp.ne.s32.totalorder %s215, %s216
      %p228 = scmp.eq.s32.totalorder %s54, 1
      %p229 = por %p227, %p228
      %p231 = scmp.ne.s32.totalorder %s216, %s230
      %p232 = scmp.eq.s32.totalorder %s54, 0
      %p233 = por %p231, %p232
      %s235 = sadd.s32 %s234, 1
      %p238 = scmp.eq.s32.totalorder %s48, 1
      %p239 = scmp.ne.s32.totalorder %s234, %s236
      %p240 = scmp.eq.s32.totalorder %s48, 0
      %p241 = por %p239, %p240
      %p242 = scmp.ne.s32.totalorder %s234, %s236
      %p243 = scmp.eq.s32.totalorder %s53, 1
      %p244 = por %p242, %p243
      %p245 = scmp.ne.s32.totalorder %s236, %s237
      %p246 = scmp.eq.s32.totalorder %s53, 0
      %p247 = por %p245, %p246
      %p248 = scmp.ne.s32.totalorder %s236, %s237
      %p249 = scmp.eq.s32.totalorder %s54, 1
      %p250 = por %p248, %p249
      %p252 = scmp.ne.s32.totalorder %s237, %s251
      %p253 = scmp.eq.s32.totalorder %s54, 0
      %p254 = por %p252, %p253
      %s256 = sadd.s32 %s255, 1
      %p259 = scmp.eq.s32.totalorder %s48, 1
      %p260 = scmp.ne.s32.totalorder %s255, %s257
      %p261 = scmp.eq.s32.totalorder %s48, 0
      %p262 = por %p260, %p261
      %p263 = scmp.ne.s32.totalorder %s255, %s257
      %p264 = scmp.eq.s32.totalorder %s53, 1
      %p265 = por %p263, %p264
      %p266 = scmp.ne.s32.totalorder %s257, %s258
      %p267 = scmp.eq.s32.totalorder %s53, 0
      %p268 = por %p266, %p267
      %p269 = scmp.ne.s32.totalorder %s257, %s258
      %p270 = scmp.eq.s32.totalorder %s54, 1
      %p271 = por %p269, %p270
      %p273 = scmp.ne.s32.totalorder %s258, %s272
      %p274 = scmp.eq.s32.totalorder %s54, 0
      %p275 = por %p273, %p274
      %s277 = sadd.s32 %s276, 1
      %p280 = scmp.eq.s32.totalorder %s48, 1
      %p281 = scmp.ne.s32.totalorder %s276, %s278
      %p282 = scmp.eq.s32.totalorder %s48, 0
      %p283 = por %p281, %p282
      %p284 = scmp.ne.s32.totalorder %s276, %s278
      %p285 = scmp.eq.s32.totalorder %s53, 1
      %p286 = por %p284, %p285
      %p287 = scmp.ne.s32.totalorder %s278, %s279
      %p288 = scmp.eq.s32.totalorder %s53, 0
      %p289 = por %p287, %p288
      %p290 = scmp.ne.s32.totalorder %s278, %s279
      %p291 = scmp.eq.s32.totalorder %s54, 1
      %p292 = por %p290, %p291
      %p294 = scmp.ne.s32.totalorder %s279, %s293
      %p295 = scmp.eq.s32.totalorder %s54, 0
      %p296 = por %p294, %p295
      %s298 = sadd.s32 %s297, 1
      %p301 = scmp.eq.s32.totalorder %s48, 1
      %p302 = scmp.ne.s32.totalorder %s297, %s299
      %p303 = scmp.eq.s32.totalorder %s48, 0
      %p304 = por %p302, %p303
      %p305 = scmp.ne.s32.totalorder %s297, %s299
      %p306 = scmp.eq.s32.totalorder %s53, 1
      %p307 = por %p305, %p306
      %p308 = scmp.ne.s32.totalorder %s299, %s300
      %p309 = scmp.eq.s32.totalorder %s53, 0
      %p310 = por %p308, %p309
      %p311 = scmp.ne.s32.totalorder %s299, %s300
      %p312 = scmp.eq.s32.totalorder %s54, 1
      %p313 = por %p311, %p312
      %p315 = scmp.ne.s32.totalorder %s300, %s314
      %p316 = scmp.eq.s32.totalorder %s54, 0
      %p317 = por %p315, %p316
      %s319 = sadd.s32 %s318, 1
      %p322 = scmp.eq.s32.totalorder %s48, 1
      %p323 = scmp.ne.s32.totalorder %s318, %s320
      %p324 = scmp.eq.s32.totalorder %s48, 0
      %p325 = por %p323, %p324
      %p326 = scmp.ne.s32.totalorder %s318, %s320
      %p327 = scmp.eq.s32.totalorder %s53, 1
      %p328 = por %p326, %p327
      %p329 = scmp.ne.s32.totalorder %s320, %s321
      %p330 = scmp.eq.s32.totalorder %s53, 0
      %p331 = por %p329, %p330
      %p332 = scmp.ne.s32.totalorder %s320, %s321
      %p333 = scmp.eq.s32.totalorder %s54, 1
      %p334 = por %p332, %p333
      %p336 = scmp.ne.s32.totalorder %s321, %s335
      %p337 = scmp.eq.s32.totalorder %s54, 0
      %p338 = por %p336, %p337
      %s340 = sadd.s32 %s339, 1
      %p343 = scmp.eq.s32.totalorder %s48, 1
      %p344 = scmp.ne.s32.totalorder %s339, %s341
      %p345 = scmp.eq.s32.totalorder %s48, 0
      %p346 = por %p344, %p345
      %p347 = scmp.ne.s32.totalorder %s339, %s341
      %p348 = scmp.eq.s32.totalorder %s53, 1
      %p349 = por %p347, %p348
      %p350 = scmp.ne.s32.totalorder %s341, %s342
      %p351 = scmp.eq.s32.totalorder %s53, 0
      %p352 = por %p350, %p351
      %p353 = scmp.ne.s32.totalorder %s341, %s342
      %p354 = scmp.eq.s32.totalorder %s54, 1
      %p355 = por %p353, %p354
      %p357 = scmp.ne.s32.totalorder %s342, %s356
      %p358 = scmp.eq.s32.totalorder %s54, 0
      %p359 = por %p357, %p358
      %s361 = sadd.s32 %s360, 1
      %p364 = scmp.eq.s32.totalorder %s48, 1
      %p365 = scmp.ne.s32.totalorder %s360, %s362
      %p366 = scmp.eq.s32.totalorder %s48, 0
      %p367 = por %p365, %p366
      %p368 = scmp.ne.s32.totalorder %s360, %s362
      %p369 = scmp.eq.s32.totalorder %s53, 1
      %p370 = por %p368, %p369
      %p371 = scmp.ne.s32.totalorder %s362, %s363
      %p372 = scmp.eq.s32.totalorder %s53, 0
      %p373 = por %p371, %p372
      %p374 = scmp.ne.s32.totalorder %s362, %s363
      %p375 = scmp.eq.s32.totalorder %s54, 1
      %p376 = por %p374, %p375
      %p378 = scmp.ne.s32.totalorder %s363, %s377
      %p379 = scmp.eq.s32.totalorder %s54, 0
      %p380 = por %p378, %p379
      %s382 = sadd.s32 %s381, 1
      %p385 = scmp.eq.s32.totalorder %s48, 1
      %p386 = scmp.ne.s32.totalorder %s381, %s383
      %p387 = scmp.eq.s32.totalorder %s48, 0
      %p388 = por %p386, %p387
      %p389 = scmp.ne.s32.totalorder %s381, %s383
      %p390 = scmp.eq.s32.totalorder %s53, 1
      %p391 = por %p389, %p390
      %p392 = scmp.ne.s32.totalorder %s383, %s384
      %p393 = scmp.eq.s32.totalorder %s53, 0
      %p394 = por %p392, %p393
      %p395 = scmp.ne.s32.totalorder %s383, %s384
      %p396 = scmp.eq.s32.totalorder %s54, 1
      %p397 = por %p395, %p396
      %p399 = scmp.ne.s32.totalorder %s384, %s398
      %p400 = scmp.eq.s32.totalorder %s54, 0
      %p401 = por %p399, %p400
      %s403 = sadd.s32 %s402, 1
      %p406 = scmp.eq.s32.totalorder %s48, 1
      %p407 = scmp.ne.s32.totalorder %s402, %s404
      %p408 = scmp.eq.s32.totalorder %s48, 0
      %p409 = por %p407, %p408
      %p410 = scmp.ne.s32.totalorder %s402, %s404
      %p411 = scmp.eq.s32.totalorder %s53, 1
      %p412 = por %p410, %p411
      %p413 = scmp.ne.s32.totalorder %s404, %s405
      %p414 = scmp.eq.s32.totalorder %s53, 0
      %p415 = por %p413, %p414
      %p416 = scmp.ne.s32.totalorder %s404, %s405
      %p417 = scmp.eq.s32.totalorder %s54, 1
      %p418 = por %p416, %p417
      %p420 = scmp.ne.s32.totalorder %s405, %s419
      %p421 = scmp.eq.s32.totalorder %s54, 0
      %p422 = por %p420, %p421
      %s424 = sadd.s32 %s423, 1
      %p427 = scmp.eq.s32.totalorder %s48, 1
      %p428 = scmp.ne.s32.totalorder %s423, %s425
      %p429 = scmp.eq.s32.totalorder %s48, 0
      %p430 = por %p428, %p429
      %p431 = scmp.ne.s32.totalorder %s423, %s425
      %p432 = scmp.eq.s32.totalorder %s53, 1
      %p433 = por %p431, %p432
      %p434 = scmp.ne.s32.totalorder %s425, %s426
      %p435 = scmp.eq.s32.totalorder %s53, 0
      %p436 = por %p434, %p435
      %p437 = scmp.ne.s32.totalorder %s425, %s426
      %p438 = scmp.eq.s32.totalorder %s54, 1
      %p439 = por %p437, %p438
      %p441 = scmp.ne.s32.totalorder %s426, %s440
      %p442 = scmp.eq.s32.totalorder %s54, 0
      %p443 = por %p441, %p442
      %s444 = ssub.s32 %s48, %s55
      %p445 = scmp.eq.s32.totalorder %s444, 0
      %s447 = sadd.s32 %s446, 1
      %s448 = scalar_select %p445, %s446, %s447
      %p451 = pneg %p445
      %p452 = scmp.eq.s32.totalorder %s48, 1
      %p453 = por %p451, %p452
      %p454 = scmp.ne.s32.totalorder %s446, %s449
      %p455 = scmp.eq.s32.totalorder %s48, 0
      %p456 = por %p454, %p455
      %p457 = scmp.ne.s32.totalorder %s446, %s449
      %p458 = scmp.eq.s32.totalorder %s53, 1
      %p459 = por %p457, %p458
      %p460 = scmp.ne.s32.totalorder %s449, %s450
      %p461 = scmp.eq.s32.totalorder %s53, 0
      %p462 = por %p460, %p461
      %p463 = scmp.ne.s32.totalorder %s449, %s450
      %p464 = scmp.eq.s32.totalorder %s54, 1
      %p465 = por %p463, %p464
      %p467 = scmp.ne.s32.totalorder %s450, %s466
      %p468 = scmp.eq.s32.totalorder %s54, 0
      %p469 = por %p467, %p468
      %s470 = ssub.s32 %s48, %s55
      %p471 = scmp.eq.s32.totalorder %s470, 0
      %s473 = sadd.s32 %s472, 1
      %s474 = scalar_select %p471, %s472, %s473
      %p477 = pneg %p471
      %p478 = scmp.eq.s32.totalorder %s48, 1
      %p479 = por %p477, %p478
      %p480 = scmp.ne.s32.totalorder %s472, %s475
      %p481 = scmp.eq.s32.totalorder %s48, 0
      %p482 = por %p480, %p481
      %p483 = scmp.ne.s32.totalorder %s472, %s475
      %p484 = scmp.eq.s32.totalorder %s53, 1
      %p485 = por %p483, %p484
      %p486 = scmp.ne.s32.totalorder %s475, %s476
      %p487 = scmp.eq.s32.totalorder %s53, 0
      %p488 = por %p486, %p487
      %p489 = scmp.ne.s32.totalorder %s475, %s476
      %p490 = scmp.eq.s32.totalorder %s54, 1
      %p491 = por %p489, %p490
      %p493 = scmp.ne.s32.totalorder %s476, %s492
      %p494 = scmp.eq.s32.totalorder %s54, 0
      %p495 = por %p493, %p494
      %s496 = ssub.s32 %s48, %s55
      %p497 = scmp.eq.s32.totalorder %s496, 0
      %s499 = sadd.s32 %s498, 1
      %s500 = scalar_select %p497, %s498, %s499
      %p503 = pneg %p497
      %p504 = scmp.eq.s32.totalorder %s48, 1
      %p505 = por %p503, %p504
      %p506 = scmp.ne.s32.totalorder %s498, %s501
      %p507 = scmp.eq.s32.totalorder %s48, 0
      %p508 = por %p506, %p507
      %p509 = scmp.ne.s32.totalorder %s498, %s501
      %p510 = scmp.eq.s32.totalorder %s53, 1
      %p511 = por %p509, %p510
      %p512 = scmp.ne.s32.totalorder %s501, %s502
      %p513 = scmp.eq.s32.totalorder %s53, 0
      %p514 = por %p512, %p513
      %p515 = scmp.ne.s32.totalorder %s501, %s502
      %p516 = scmp.eq.s32.totalorder %s54, 1
      %p517 = por %p515, %p516
      %p519 = scmp.ne.s32.totalorder %s502, %s518
      %p520 = scmp.eq.s32.totalorder %s54, 0
      %p521 = por %p519, %p520
      %s522 = ssub.s32 %s48, %s55
      %p523 = scmp.eq.s32.totalorder %s522, 0
      %s525 = sadd.s32 %s524, 1
      %s526 = scalar_select %p523, %s524, %s525
      %p529 = pneg %p523
      %p530 = scmp.eq.s32.totalorder %s48, 1
      %p531 = por %p529, %p530
      %p532 = scmp.ne.s32.totalorder %s524, %s527
      %p533 = scmp.eq.s32.totalorder %s48, 0
      %p534 = por %p532, %p533
      %p535 = scmp.ne.s32.totalorder %s524, %s527
      %p536 = scmp.eq.s32.totalorder %s53, 1
      %p537 = por %p535, %p536
      %p538 = scmp.ne.s32.totalorder %s527, %s528
      %p539 = scmp.eq.s32.totalorder %s53, 0
      %p540 = por %p538, %p539
      %p541 = scmp.ne.s32.totalorder %s527, %s528
      %p542 = scmp.eq.s32.totalorder %s54, 1
      %p543 = por %p541, %p542
      %p545 = scmp.ne.s32.totalorder %s528, %s544
      %p546 = scmp.eq.s32.totalorder %s54, 0
      %p547 = por %p545, %p546
      %s548 = ssub.s32 %s48, %s55
      %p549 = scmp.eq.s32.totalorder %s548, 0
      %s551 = sadd.s32 %s550, 1
      %s552 = scalar_select %p549, %s550, %s551
      %p555 = pneg %p549
      %p556 = scmp.eq.s32.totalorder %s48, 1
      %p557 = por %p555, %p556
      %p558 = scmp.ne.s32.totalorder %s550, %s553
      %p559 = scmp.eq.s32.totalorder %s48, 0
      %p560 = por %p558, %p559
      %p561 = scmp.ne.s32.totalorder %s550, %s553
      %p562 = scmp.eq.s32.totalorder %s53, 1
      %p563 = por %p561, %p562
      %p564 = scmp.ne.s32.totalorder %s553, %s554
      %p565 = scmp.eq.s32.totalorder %s53, 0
      %p566 = por %p564, %p565
      %p567 = scmp.ne.s32.totalorder %s553, %s554
      %p568 = scmp.eq.s32.totalorder %s54, 1
      %p569 = por %p567, %p568
      %p571 = scmp.ne.s32.totalorder %s554, %s570
      %p572 = scmp.eq.s32.totalorder %s54, 0
      %p573 = por %p571, %p572
      %p574 = scmp.le.s32.totalorder 1, %s48
      %p575 = scmp.lt.s32.totalorder %s48, 3
      %p576 = pnand %p574, %p575
      %p577 = pneg %p576
      // Predicated region
      $region9: #{tpu_custom_call.1} parent=5 // pred_check
        _
      $region10: #{tpu_custom_call.1} parent=5 // pred_check_branch
        %579 = sbr.rel (%p576) target = $region12
      $region11: #{tpu_custom_call.1} parent=5 // pred_region
        %s580 = ssub.s32 %s48, 1
        // Predicated region
        $region13: #{tpu_custom_call.1} parent=11 // pred_check
          %p581 = pneg %p121
        $region14: #{tpu_custom_call.1} parent=11 // pred_check_branch
          %583 = sbr.rel (%p581) target = $region16
        $region15: #{tpu_custom_call.1} parent=11 // pred_region
          _
        $region16: #{tpu_custom_call.1} parent=11 // pred_fallthru
          _
        // Predicated region
        $region17: #{tpu_custom_call.1} parent=11 // pred_check
          %p584 = pneg %p142
        $region18: #{tpu_custom_call.1} parent=11 // pred_check_branch
          %586 = sbr.rel (%p584) target = $region20
        $region19: #{tpu_custom_call.1} parent=11 // pred_region
          %s588 = ssub.s32 256, 256
          %589 = vsyncadd [#allocation6], %s588
          %s590 = sshll.u32 [#allocation7], 4
          %s591 = int_to_ptr.vmem [resolvable:$true] %s590
          %596 = dma.hbm_to_vmem [thread:$0]  %s3, 256, %s591, [#allocation6], 128, 128, 8
        $region20: #{tpu_custom_call.1} parent=11 // pred_fallthru
          _
        // Predicated region
        $region21: #{tpu_custom_call.1} parent=11 // pred_check
          %p597 = pneg %p163
        $region22: #{tpu_custom_call.1} parent=11 // pred_check_branch
          %599 = sbr.rel (%p597) target = $region24
        $region23: #{tpu_custom_call.1} parent=11 // pred_region
          _
        $region24: #{tpu_custom_call.1} parent=11 // pred_fallthru
          _
        // Predicated region
        $region25: #{tpu_custom_call.1} parent=11 // pred_check
          %p600 = pneg %p184
        $region26: #{tpu_custom_call.1} parent=11 // pred_check_branch
          %602 = sbr.rel (%p600) target = $region28
        $region27: #{tpu_custom_call.1} parent=11 // pred_region
          %s604 = ssub.s32 16, 16
          %605 = vsyncadd [#allocation9], %s604
          %s607 = sshll.u32 [#allocation8], 4
          %s608 = int_to_ptr.vmem [resolvable:$true] %s607
          %610 = dma.hbm_to_vmem [thread:$0]  %s5, 16, %s608, [#allocation9]
        $region28: #{tpu_custom_call.1} parent=11 // pred_fallthru
          _
        // Predicated region
        $region29: #{tpu_custom_call.1} parent=11 // pred_check
          %p611 = pneg %p205
        $region30: #{tpu_custom_call.1} parent=11 // pred_check_branch
          %613 = sbr.rel (%p611) target = $region32
        $region31: #{tpu_custom_call.1} parent=11 // pred_region
          %s615 = ssub.s32 512, 512
          %616 = vsyncadd [#allocation9], %s615
          %s617 = sshll.u32 [#allocation10], 4
          %s618 = int_to_ptr.vmem [resolvable:$true] %s617
          %623 = dma.hbm_to_vmem [thread:$0]  %s6, 512, %s618, [#allocation9], 128, 128, 8
        $region32: #{tpu_custom_call.1} parent=11 // pred_fallthru
          _
        // Predicated region
        $region33: #{tpu_custom_call.1} parent=11 // pred_check
          %p624 = pneg %p226
        $region34: #{tpu_custom_call.1} parent=11 // pred_check_branch
          %626 = sbr.rel (%p624) target = $region36
        $region35: #{tpu_custom_call.1} parent=11 // pred_region
          %s628 = ssub.s32 16, 16
          %629 = vsyncadd [#allocation12], %s628
          %s631 = sshll.u32 [#allocation11], 4
          %s632 = int_to_ptr.vmem [resolvable:$true] %s631
          %634 = dma.hbm_to_vmem [thread:$0]  %s7, 16, %s632, [#allocation12]
        $region36: #{tpu_custom_call.1} parent=11 // pred_fallthru
          _
        // Predicated region
        $region37: #{tpu_custom_call.1} parent=11 // pred_check
          %p635 = pneg %p247
        $region38: #{tpu_custom_call.1} parent=11 // pred_check_branch
          %637 = sbr.rel (%p635) target = $region40
        $region39: #{tpu_custom_call.1} parent=11 // pred_region
          %s639 = ssub.s32 16, 16
          %640 = vsyncadd [#allocation12], %s639
          %s642 = sshll.u32 [#allocation13], 4
          %s643 = int_to_ptr.vmem [resolvable:$true] %s642
          %645 = dma.hbm_to_vmem [thread:$0]  %s8, 16, %s643, [#allocation12]
        $region40: #{tpu_custom_call.1} parent=11 // pred_fallthru
          _
        // Predicated region
        $region41: #{tpu_custom_call.1} parent=11 // pred_check
          %p646 = pneg %p268
        $region42: #{tpu_custom_call.1} parent=11 // pred_check_branch
          %648 = sbr.rel (%p646) target = $region44
        $region43: #{tpu_custom_call.1} parent=11 // pred_region
          %s650 = ssub.s32 16, 16
          %651 = vsyncadd [#allocation15], %s650
          %s653 = sshll.u32 [#allocation14], 4
          %s654 = int_to_ptr.vmem [resolvable:$true] %s653
          %656 = dma.hbm_to_vmem [thread:$0]  %s9, 16, %s654, [#allocation15]
        $region44: #{tpu_custom_call.1} parent=11 // pred_fallthru
          _
        // Predicated region
        $region45: #{tpu_custom_call.1} parent=11 // pred_check
          %p657 = pneg %p289
        $region46: #{tpu_custom_call.1} parent=11 // pred_check_branch
          %659 = sbr.rel (%p657) target = $region48
        $region47: #{tpu_custom_call.1} parent=11 // pred_region
          _
        $region48: #{tpu_custom_call.1} parent=11 // pred_fallthru
          _
        // Predicated region
        $region49: #{tpu_custom_call.1} parent=11 // pred_check
          %p660 = pneg %p310
        $region50: #{tpu_custom_call.1} parent=11 // pred_check_branch
          %662 = sbr.rel (%p660) target = $region52
        $region51: #{tpu_custom_call.1} parent=11 // pred_region
          _
        $region52: #{tpu_custom_call.1} parent=11 // pred_fallthru
          _
        // Predicated region
        $region53: #{tpu_custom_call.1} parent=11 // pred_check
          %p663 = pneg %p331
        $region54: #{tpu_custom_call.1} parent=11 // pred_check_branch
          %665 = sbr.rel (%p663) target = $region56
        $region55: #{tpu_custom_call.1} parent=11 // pred_region
          %s667 = ssub.s32 512, 512
          %668 = vsyncadd [#allocation15], %s667
          %s669 = sshll.u32 [#allocation16], 4
          %s670 = int_to_ptr.vmem [resolvable:$true] %s669
          %675 = dma.hbm_to_vmem [thread:$0]  %s12, 512, %s670, [#allocation15], 128, 128, 8
        $region56: #{tpu_custom_call.1} parent=11 // pred_fallthru
          _
        // Predicated region
        $region57: #{tpu_custom_call.1} parent=11 // pred_check
          %p676 = pneg %p352
        $region58: #{tpu_custom_call.1} parent=11 // pred_check_branch
          %678 = sbr.rel (%p676) target = $region60
        $region59: #{tpu_custom_call.1} parent=11 // pred_region
          _
        $region60: #{tpu_custom_call.1} parent=11 // pred_fallthru
          _
        // Predicated region
        $region61: #{tpu_custom_call.1} parent=11 // pred_check
          %p679 = pneg %p373
        $region62: #{tpu_custom_call.1} parent=11 // pred_check_branch
          %681 = sbr.rel (%p679) target = $region64
        $region63: #{tpu_custom_call.1} parent=11 // pred_region
          %s683 = ssub.s32 512, 512
          %684 = vsyncadd [#allocation18], %s683
          %s685 = sshll.u32 [#allocation17], 4
          %s686 = int_to_ptr.vmem [resolvable:$true] %s685
          %691 = dma.hbm_to_vmem [thread:$0]  %s14, 512, %s686, [#allocation18], 128, 128, 8
        $region64: #{tpu_custom_call.1} parent=11 // pred_fallthru
          _
        // Predicated region
        $region65: #{tpu_custom_call.1} parent=11 // pred_check
          %p692 = pneg %p394
        $region66: #{tpu_custom_call.1} parent=11 // pred_check_branch
          %694 = sbr.rel (%p692) target = $region68
        $region67: #{tpu_custom_call.1} parent=11 // pred_region
          _
        $region68: #{tpu_custom_call.1} parent=11 // pred_fallthru
          _
        // Predicated region
        $region69: #{tpu_custom_call.1} parent=11 // pred_check
          %p695 = pneg %p415
        $region70: #{tpu_custom_call.1} parent=11 // pred_check_branch
          %697 = sbr.rel (%p695) target = $region72
        $region71: #{tpu_custom_call.1} parent=11 // pred_region
          %s699 = ssub.s32 512, 512
          %700 = vsyncadd [#allocation18], %s699
          %s701 = sshll.u32 [#allocation19], 4
          %s702 = int_to_ptr.vmem [resolvable:$true] %s701
          %707 = dma.hbm_to_vmem [thread:$0]  %s16, 512, %s702, [#allocation18], 128, 128, 8
        $region72: #{tpu_custom_call.1} parent=11 // pred_fallthru
          _
        // Predicated region
        $region73: #{tpu_custom_call.1} parent=11 // pred_check
          %p708 = pneg %p436
        $region74: #{tpu_custom_call.1} parent=11 // pred_check_branch
          %710 = sbr.rel (%p708) target = $region76
        $region75: #{tpu_custom_call.1} parent=11 // pred_region
          _
        $region76: #{tpu_custom_call.1} parent=11 // pred_fallthru
          _
      $region12: #{tpu_custom_call.1} parent=5 // pred_fallthru
        _
      %p711 = scmp.lt.s32.totalorder %s48, 2
      // Predicated region
      $region77: #{tpu_custom_call.1} parent=5 // pred_check
        %p712 = pneg %p711
      $region78: #{tpu_custom_call.1} parent=5 // pred_check_branch
        %714 = sbr.rel (%p712) target = $region80
      $region79: #{tpu_custom_call.1} parent=5 // pred_region
        // Predicated region
        $region81: #{tpu_custom_call.1} parent=79 // pred_check
          %p715 = pneg %p68
        $region82: #{tpu_custom_call.1} parent=79 // pred_check_branch
          %717 = sbr.rel (%p715) target = $region84
        $region83: #{tpu_custom_call.1} parent=79 // pred_region
          %s718 = sand.u32 %s58, 1
          %s719 = scalar_lea.sflag [#allocation3], %s718
          %s720 = sand.u32 %s58, 1
          %s721 = smul.addr %s720, 8
          %s722 = scalar_lea.vmem [#allocation2], %s721
          %s724 = ssub.s32 128, 128
          %725 = vsyncadd %s719, %s724
          %s726 = smul.addr %s48, 128
          %s727 = scalar_lea.hbm %s0, %s726
          %s729 = sshll.u32 %s722, 4
          %s730 = int_to_ptr.vmem [resolvable:$true] %s729
          %732 = dma.hbm_to_vmem [thread:$0]  %s727, 128, %s730, %s719
        $region84: #{tpu_custom_call.1} parent=79 // pred_fallthru
          _
        // Predicated region
        $region85: #{tpu_custom_call.1} parent=79 // pred_check
          %p733 = pneg %p94
        $region86: #{tpu_custom_call.1} parent=79 // pred_check_branch
          %735 = sbr.rel (%p733) target = $region88
        $region87: #{tpu_custom_call.1} parent=79 // pred_region
          %s736 = sand.u32 %s48, 1
          %s737 = scalar_lea.sflag [#allocation6], %s736
          %s738 = sand.u32 %s84, 1
          %s739 = smul.addr %s738, 8
          %s740 = scalar_lea.vmem [#allocation5], %s739
          %s742 = ssub.s32 128, 128
          %743 = vsyncadd %s737, %s742
          %s744 = smul.addr %s48, 128
          %s745 = scalar_lea.hbm %s1, %s744
          %s747 = sshll.u32 %s740, 4
          %s748 = int_to_ptr.vmem [resolvable:$true] %s747
          %750 = dma.hbm_to_vmem [thread:$0]  %s745, 128, %s748, %s737
        $region88: #{tpu_custom_call.1} parent=79 // pred_fallthru
          _
      $region80: #{tpu_custom_call.1} parent=5 // pred_fallthru
        _
      %p751 = scmp.le.s32.totalorder 1, %s48
      %p752 = scmp.lt.s32.totalorder %s48, 3
      %p753 = pnand %p751, %p752
      %p754 = pneg %p753
      // Predicated region
      $region89: #{tpu_custom_call.1} parent=5 // pred_check
        _
      $region90: #{tpu_custom_call.1} parent=5 // pred_check_branch
        %756 = sbr.rel (%p753) target = $region92
      $region91: #{tpu_custom_call.1} parent=5 // pred_region
        %s757 = ssub.s32 %s48, 1
        %s758 = sand.u32 %s61, 1
        %s759 = scalar_lea.sflag [#allocation3], %s758
        %s760 = sand.u32 %s61, 1
        %s761 = smul.addr %s760, 8
        %s762 = scalar_lea.vmem [#allocation2], %s761
        // Predicated region
        $region93: #{tpu_custom_call.1} parent=91 // pred_check
          %p763 = pneg %p74
        $region94: #{tpu_custom_call.1} parent=91 // pred_check_branch
          %765 = sbr.rel (%p763) target = $region96
        $region95: #{tpu_custom_call.1} parent=91 // pred_region
          %766 = dma.done %s759, 128
        $region96: #{tpu_custom_call.1} parent=91 // pred_fallthru
          _
        %s767 = sand.u32 %s53, 1
        %s768 = scalar_lea.sflag [#allocation6], %s767
        %s769 = sand.u32 %s87, 1
        %s770 = smul.addr %s769, 8
        %s771 = scalar_lea.vmem [#allocation5], %s770
        // Predicated region
        $region97: #{tpu_custom_call.1} parent=91 // pred_check
          %p772 = pneg %p100
        $region98: #{tpu_custom_call.1} parent=91 // pred_check_branch
          %774 = sbr.rel (%p772) target = $region100
        $region99: #{tpu_custom_call.1} parent=91 // pred_region
          %775 = dma.done %s768, 128
        $region100: #{tpu_custom_call.1} parent=91 // pred_fallthru
          _
        // Predicated region
        $region101: #{tpu_custom_call.1} parent=91 // pred_check
          %p776 = pneg %p142
        $region102: #{tpu_custom_call.1} parent=91 // pred_check_branch
          %778 = sbr.rel (%p776) target = $region104
        $region103: #{tpu_custom_call.1} parent=91 // pred_region
          %779 = dma.done [#allocation6], 256
        $region104: #{tpu_custom_call.1} parent=91 // pred_fallthru
          _
        // Predicated region
        $region105: #{tpu_custom_call.1} parent=91 // pred_check
          %p780 = pneg %p184
        $region106: #{tpu_custom_call.1} parent=91 // pred_check_branch
          %782 = sbr.rel (%p780) target = $region108
        $region107: #{tpu_custom_call.1} parent=91 // pred_region
          %783 = dma.done [#allocation9], 16
        $region108: #{tpu_custom_call.1} parent=91 // pred_fallthru
          _
        // Predicated region
        $region109: #{tpu_custom_call.1} parent=91 // pred_check
          %p784 = pneg %p205
        $region110: #{tpu_custom_call.1} parent=91 // pred_check_branch
          %786 = sbr.rel (%p784) target = $region112
        $region111: #{tpu_custom_call.1} parent=91 // pred_region
          %787 = dma.done [#allocation9], 512
        $region112: #{tpu_custom_call.1} parent=91 // pred_fallthru
          _
        // Predicated region
        $region113: #{tpu_custom_call.1} parent=91 // pred_check
          %p788 = pneg %p226
        $region114: #{tpu_custom_call.1} parent=91 // pred_check_branch
          %790 = sbr.rel (%p788) target = $region116
        $region115: #{tpu_custom_call.1} parent=91 // pred_region
          %791 = dma.done [#allocation12], 16
        $region116: #{tpu_custom_call.1} parent=91 // pred_fallthru
          _
        // Predicated region
        $region117: #{tpu_custom_call.1} parent=91 // pred_check
          %p792 = pneg %p247
        $region118: #{tpu_custom_call.1} parent=91 // pred_check_branch
          %794 = sbr.rel (%p792) target = $region120
        $region119: #{tpu_custom_call.1} parent=91 // pred_region
          %795 = dma.done [#allocation12], 16
        $region120: #{tpu_custom_call.1} parent=91 // pred_fallthru
          _
        // Predicated region
        $region121: #{tpu_custom_call.1} parent=91 // pred_check
          %p796 = pneg %p268
        $region122: #{tpu_custom_call.1} parent=91 // pred_check_branch
          %798 = sbr.rel (%p796) target = $region124
        $region123: #{tpu_custom_call.1} parent=91 // pred_region
          %799 = dma.done [#allocation15], 16
        $region124: #{tpu_custom_call.1} parent=91 // pred_fallthru
          _
        // Predicated region
        $region125: #{tpu_custom_call.1} parent=91 // pred_check
          %p800 = pneg %p331
        $region126: #{tpu_custom_call.1} parent=91 // pred_check_branch
          %802 = sbr.rel (%p800) target = $region128
        $region127: #{tpu_custom_call.1} parent=91 // pred_region
          %803 = dma.done [#allocation15], 512
        $region128: #{tpu_custom_call.1} parent=91 // pred_fallthru
          _
        // Predicated region
        $region129: #{tpu_custom_call.1} parent=91 // pred_check
          %p804 = pneg %p373
        $region130: #{tpu_custom_call.1} parent=91 // pred_check_branch
          %806 = sbr.rel (%p804) target = $region132
        $region131: #{tpu_custom_call.1} parent=91 // pred_region
          %807 = dma.done [#allocation18], 512
        $region132: #{tpu_custom_call.1} parent=91 // pred_fallthru
          _
        // Predicated region
        $region133: #{tpu_custom_call.1} parent=91 // pred_check
          %p808 = pneg %p415
        $region134: #{tpu_custom_call.1} parent=91 // pred_check_branch
          %810 = sbr.rel (%p808) target = $region136
        $region135: #{tpu_custom_call.1} parent=91 // pred_region
          %811 = dma.done [#allocation18], 512
        $region136: #{tpu_custom_call.1} parent=91 // pred_fallthru
          _
        %s812 = sand.u32 %s61, 1
        %s813 = scalar_lea.sflag [#allocation3], %s812
        %s814 = sand.u32 %s61, 1
        %s815 = smul.addr %s814, 8
        %s816 = scalar_lea.vmem [#allocation2], %s815
        %p817 = pneg %p74
        %p818 = pneg %p71
        %s819 = sand.u32 %s53, 1
        %s820 = scalar_lea.sflag [#allocation6], %s819
        %s821 = sand.u32 %s87, 1
        %s822 = smul.addr %s821, 8
        %s823 = scalar_lea.vmem [#allocation5], %s822
        %p824 = pneg %p100
        %p825 = pneg %p97
        %p826 = pneg %p121
        %p827 = pneg %p118
        %p828 = pneg %p142
        %p829 = pneg %p139
        %p830 = pneg %p163
        %p831 = pneg %p160
        %p832 = pneg %p184
        %p833 = pneg %p181
        %p834 = pneg %p205
        %p835 = pneg %p202
        %p836 = pneg %p226
        %p837 = pneg %p223
        %p838 = pneg %p247
        %p839 = pneg %p244
        %p840 = pneg %p268
        %p841 = pneg %p265
        %p842 = pneg %p289
        %p843 = pneg %p286
        %p844 = pneg %p310
        %p845 = pneg %p307
        %p846 = pneg %p331
        %p847 = pneg %p328
        %p848 = pneg %p352
        %p849 = pneg %p349
        %p850 = pneg %p373
        %p851 = pneg %p370
        %p852 = pneg %p394
        %p853 = pneg %p391
        %p854 = pneg %p415
        %p855 = pneg %p412
        %p856 = pneg %p436
        %p857 = pneg %p433
        %p858 = pneg %p462
        %p859 = pneg %p459
        %s860 = sand.u32 %s449, 1
        %s861 = scalar_lea.sflag [#allocation4], %s860
        %s862 = sand.u32 %s449, 1
        %s863 = smul.addr %s862, 8
        %s864 = scalar_lea.vmem [#allocation20], %s863
        %p865 = pneg %p488
        %p866 = pneg %p485
        %s867 = sand.u32 %s53, 1
        %s868 = scalar_lea.sflag [#allocation22], %s867
        %s869 = sand.u32 %s475, 1
        %s870 = smul.addr %s869, 8
        %s871 = scalar_lea.vmem [#allocation21], %s870
        %p872 = pneg %p514
        %p873 = pneg %p511
        %s874 = sand.u32 %s53, 1
        %s875 = scalar_lea.sflag [#allocation22], %s874
        %s876 = sand.u32 %s501, 1
        %s877 = smul.addr %s876, 8
        %s878 = scalar_lea.vmem [#allocation23], %s877
        %p879 = pneg %p540
        %p880 = pneg %p537
        %s881 = sand.u32 %s53, 1
        %s882 = scalar_lea.sflag [#allocation25], %s881
        %s883 = sand.u32 %s527, 1
        %s884 = smul.addr %s883, 8
        %s885 = scalar_lea.vmem [#allocation24], %s884
        %p886 = pneg %p566
        %p887 = pneg %p563
        %s888 = sand.u32 %s53, 1
        %s889 = scalar_lea.sflag [#allocation25], %s888
        %s890 = sand.u32 %s553, 1
        %s891 = smul.addr %s890, 8
        %s892 = scalar_lea.vmem [#allocation26], %s891
        %v894 = vld [vmem:[%s762] sm:$0xff]
        %v895 = vld [vmem:[%s771] sm:$0xff]
        %v896 = vld [vmem:[%s2] sm:$0xff]
        %v897 = vld [vmem:[%s2 + $0x8] sm:$0xff]
        %v898 = vld [vmem:[%s2 + $0x10] sm:$0xff]
        %v899 = vld [vmem:[%s2 + $0x18] sm:$0xff]
        %v900 = vld [vmem:[#allocation7] sm:$0xff]
        %v901 = vld [vmem:[#allocation7 + $0x8] sm:$0xff]
        %v902 = vld [vmem:[%s4] sm:$0xff]
        %v903 = vld [vmem:[%s4 + $0x8] sm:$0xff]
        %v904 = vld [vmem:[%s4 + $0x10] sm:$0xff]
        %v905 = vld [vmem:[%s4 + $0x18] sm:$0xff]
        %v906 = vpack.c.bf16 %v895, %v895
        %v907 = vpack.c.bf16 %v903, %v902
        %v908 = vpack.c.bf16 %v905, %v904
        %v909 = vld [vmem:[#allocation8] sm:$0x1]
        %v911 = vlaneseq
        %v912 = vshrl.u32 %v911, 7
        %v913 = vsub.s32 0, %v912
        %v914 = vrot.slane %v909, %v913
        %vm916 = vcmask 261120
        %v918 = vsel %vm916, %v906, 0
        %920 = vmatprep.subr.bf16.mxu0 0
        %921 = vmatpush1.bf16.msra.mxu0 0
        %922 = vmatprep.subr.bf16.mxu0 0
        %923 = vmatpush1.bf16.msra.mxu0 0
        %924 = vmatprep.subr.bf16.mxu0 0
        %925 = vmatpush1.bf16.msra.mxu0 0
        %926 = vmatprep.subr.bf16.mxu0 0
        %927 = vmatpush1.bf16.msra.mxu0 0
        %928 = vmatprep.subr.bf16.mxu0 0
        %929 = vmatpush1.bf16.msra.mxu0 0
        %930 = vmatprep.subr.bf16.mxu0 0
        %931 = vmatpush1.bf16.msra.mxu0 0
        %932 = vmatprep.subr.bf16.mxu0 0
        %933 = vmatpush1.bf16.msra.mxu0 %v908
        %934 = vmatprep.subr.bf16.mxu0 0
        %935 = vmatpush1.bf16.msra.mxu0 %v907
        %936 = vmatprep.subr.bf16.mxu0 0
        %937 = vmatpush2.bf16.msra.mxu0 0
        %938 = vmatprep.subr.bf16.mxu0 0
        %939 = vmatpush2.bf16.msra.mxu0 0
        %940 = vmatprep.subr.bf16.mxu0 0
        %941 = vmatpush2.bf16.msra.mxu0 0
        %942 = vmatprep.subr.bf16.mxu0 0
        %943 = vmatpush2.bf16.msra.mxu0 0
        %944 = vmatprep.subr.bf16.mxu0 0
        %945 = vmatpush2.bf16.msra.mxu0 0
        %946 = vmatprep.subr.bf16.mxu0 0
        %947 = vmatpush2.bf16.msra.mxu0 0
        %948 = vmatprep.subr.bf16.mxu0 0
        %949 = vmatpush2.bf16.msra.mxu0 0
        %950 = vmatprep.subr.bf16.mxu0 0
        %951 = vmatpush2.bf16.msra.mxu0 0
        %952 = vmatprep.mubr.bf16.mxu0 0
        %953 = vmatmul.mubr.bf16.gmra.mxu0 %v918
        %v954 = vpop.f32.mrf.mxu0
        %v955 = vadd.f32 %v914, %v954
        %v956 = vpop.f32.mrf.mxu0
        %v957 = vpop.f32.mrf.mxu0
        %v958 = vpop.f32.mrf.mxu0
        %959 = vdwg.mxu0
        %v960 = vmul.f32 %v955, 0.35355338
        %v961 = vpack.c.bf16 %v960, %v960
        %v962 = vpack.c.bf16 %v896, %v896
        %vm963 = vcmask 64512
        %v965 = vsel %vm963, %v961, 0
        %vm967 = vcmask 1043456
        %v969 = vsel %vm967, %v962, 0
        %971 = vmatprep.subr.bf16.mxu0 0
        %972 = vmatpush1.bf16.msra.mxu0 0
        %973 = vmatprep.subr.bf16.mxu0 0
        %974 = vmatpush1.bf16.msra.mxu0 0
        %975 = vmatprep.subr.bf16.mxu0 0
        %976 = vmatpush1.bf16.msra.mxu0 0
        %977 = vmatprep.subr.bf16.mxu0 0
        %978 = vmatpush1.bf16.msra.mxu0 0
        %979 = vmatprep.subr.bf16.mxu0 0
        %980 = vmatpush1.bf16.msra.mxu0 0
        %981 = vmatprep.subr.bf16.mxu0 0
        %982 = vmatpush1.bf16.msra.mxu0 0
        %983 = vmatprep.subr.bf16.mxu0 0
        %984 = vmatpush1.bf16.msra.mxu0 0
        %985 = vmatprep.subr.bf16.mxu0 0
        %986 = vmatpush1.bf16.msra.mxu0 %v969
        %987 = vmatprep.subr.bf16.mxu0 0
        %988 = vmatpush2.bf16.msra.mxu0 0
        %989 = vmatprep.subr.bf16.mxu0 0
        %990 = vmatpush2.bf16.msra.mxu0 0
        %991 = vmatprep.subr.bf16.mxu0 0
        %992 = vmatpush2.bf16.msra.mxu0 0
        %993 = vmatprep.subr.bf16.mxu0 0
        %994 = vmatpush2.bf16.msra.mxu0 0
        %995 = vmatprep.subr.bf16.mxu0 0
        %996 = vmatpush2.bf16.msra.mxu0 0
        %997 = vmatprep.subr.bf16.mxu0 0
        %998 = vmatpush2.bf16.msra.mxu0 0
        %999 = vmatprep.subr.bf16.mxu0 0
        %1000 = vmatpush2.bf16.msra.mxu0 0
        %1001 = vmatprep.subr.bf16.mxu0 0
        %1002 = vmatpush2.bf16.msra.mxu0 0
        %1003 = vmatprep.mubr.bf16.mxu0 0
        %1004 = vmatmul.mubr.bf16.gmra.mxu0 %v965
        %v1005 = vpop.f32.mrf.mxu0
        %v1006 = vadd.f32 0.0, %v1005
        %v1007 = vpop.f32.mrf.mxu0
        %v1008 = vpop.f32.mrf.mxu0
        %v1009 = vpop.f32.mrf.mxu0
        %1010 = vdwg.mxu0
        %vm1011 = vcmask 130048
        %v1012 = vsel %vm1011, %v1006, -inf
        %1013 = vmax.xlane.f32.xlu0 %v1012
        %v1014 = vpop.xlane.xlu0 %1013
        %v1015 = vsub.f32 %v1006, %v1014
        %v1016 = vmul.f32 %v1015, 1.442695
        %v1017 = vpow.pop %v1016
        %v1018 = vsel %vm1011, %v1017, 0.0
        %1019 = vadd.xlane.f32.xlu0 %v1018
        %v1020 = vpop.xlane.xlu0 %1019
        %v1021 = vrcp.pop %v1020
        %v1022 = vmul.f32 %v1017, %v1021
        %v1023 = vpack.c.bf16 %v1022, %v1022
        %v1024 = vpack.c.bf16 %v901, %v900
        %v1026 = vsel %vm1011, %v1023, 0
        %1028 = vmatprep.subr.bf16.mxu0 0
        %1029 = vmatpush1.bf16.msra.mxu0 0
        %1030 = vmatprep.subr.bf16.mxu0 0
        %1031 = vmatpush1.bf16.msra.mxu0 0
        %1032 = vmatprep.subr.bf16.mxu0 0
        %1033 = vmatpush1.bf16.msra.mxu0 0
        %1034 = vmatprep.subr.bf16.mxu0 0
        %1035 = vmatpush1.bf16.msra.mxu0 0
        %1036 = vmatprep.subr.bf16.mxu0 0
        %1037 = vmatpush1.bf16.msra.mxu0 0
        %1038 = vmatprep.subr.bf16.mxu0 0
        %1039 = vmatpush1.bf16.msra.mxu0 0
        %1040 = vmatprep.subr.bf16.mxu0 0
        %1041 = vmatpush1.bf16.msra.mxu0 0
        %1042 = vmatprep.subr.bf16.mxu0 0
        %1043 = vmatpush1.bf16.msra.mxu0 %v1024
        %1044 = vmatprep.subr.bf16.mxu0 0
        %1045 = vmatpush2.bf16.msra.mxu0 0
        %1046 = vmatprep.subr.bf16.mxu0 0
        %1047 = vmatpush2.bf16.msra.mxu0 0
        %1048 = vmatprep.subr.bf16.mxu0 0
        %1049 = vmatpush2.bf16.msra.mxu0 0
        %1050 = vmatprep.subr.bf16.mxu0 0
        %1051 = vmatpush2.bf16.msra.mxu0 0
        %1052 = vmatprep.subr.bf16.mxu0 0
        %1053 = vmatpush2.bf16.msra.mxu0 0
        %1054 = vmatprep.subr.bf16.mxu0 0
        %1055 = vmatpush2.bf16.msra.mxu0 0
        %1056 = vmatprep.subr.bf16.mxu0 0
        %1057 = vmatpush2.bf16.msra.mxu0 0
        %1058 = vmatprep.subr.bf16.mxu0 0
        %1059 = vmatpush2.bf16.msra.mxu0 0
        %1060 = vmatprep.mubr.bf16.mxu0 0
        %1061 = vmatmul.mubr.bf16.gmra.mxu0 %v1026
        %v1062 = vpop.f32.mrf.mxu0
        %v1063 = vadd.f32 0.0, %v1062
        %v1064 = vpop.f32.mrf.mxu0
        %v1065 = vpop.f32.mrf.mxu0
        %v1066 = vpop.f32.mrf.mxu0
        %1067 = vdwg.mxu0
        %v1068 = vld [vmem:[#allocation10] sm:$0xff]
        %v1069 = vpack.c.bf16 %v1063, %v1063
        %v1070 = vpack.c.bf16 %v1068, %v1068
        %v1071 = vpack.c.bf16 %v897, %v897
        %1073 = vrot.lane.b32.xlu0 %v961, 120
        %v1074 = vpop.permute.xlu0 %1073
        %v1076 = vsel %vm963, %v1074, 0
        %v1079 = vsel %vm967, %v1071, 0
        %1081 = vmatprep.subr.bf16.mxu0 0
        %1082 = vmatpush1.bf16.msra.mxu0 0
        %1083 = vmatprep.subr.bf16.mxu0 0
        %1084 = vmatpush1.bf16.msra.mxu0 0
        %1085 = vmatprep.subr.bf16.mxu0 0
        %1086 = vmatpush1.bf16.msra.mxu0 0
        %1087 = vmatprep.subr.bf16.mxu0 0
        %1088 = vmatpush1.bf16.msra.mxu0 0
        %1089 = vmatprep.subr.bf16.mxu0 0
        %1090 = vmatpush1.bf16.msra.mxu0 0
        %1091 = vmatprep.subr.bf16.mxu0 0
        %1092 = vmatpush1.bf16.msra.mxu0 0
        %1093 = vmatprep.subr.bf16.mxu0 0
        %1094 = vmatpush1.bf16.msra.mxu0 0
        %1095 = vmatprep.subr.bf16.mxu0 0
        %1096 = vmatpush1.bf16.msra.mxu0 %v1079
        %1097 = vmatprep.subr.bf16.mxu0 0
        %1098 = vmatpush2.bf16.msra.mxu0 0
        %1099 = vmatprep.subr.bf16.mxu0 0
        %1100 = vmatpush2.bf16.msra.mxu0 0
        %1101 = vmatprep.subr.bf16.mxu0 0
        %1102 = vmatpush2.bf16.msra.mxu0 0
        %1103 = vmatprep.subr.bf16.mxu0 0
        %1104 = vmatpush2.bf16.msra.mxu0 0
        %1105 = vmatprep.subr.bf16.mxu0 0
        %1106 = vmatpush2.bf16.msra.mxu0 0
        %1107 = vmatprep.subr.bf16.mxu0 0
        %1108 = vmatpush2.bf16.msra.mxu0 0
        %1109 = vmatprep.subr.bf16.mxu0 0
        %1110 = vmatpush2.bf16.msra.mxu0 0
        %1111 = vmatprep.subr.bf16.mxu0 0
        %1112 = vmatpush2.bf16.msra.mxu0 0
        %1113 = vmatprep.mubr.bf16.mxu0 0
        %1114 = vmatmul.mubr.bf16.gmra.mxu0 %v1076
        %v1115 = vpop.f32.mrf.mxu0
        %v1116 = vadd.f32 0.0, %v1115
        %v1117 = vpop.f32.mrf.mxu0
        %v1118 = vpop.f32.mrf.mxu0
        %v1119 = vpop.f32.mrf.mxu0
        %1120 = vdwg.mxu0
        %v1121 = vsel %vm1011, %v1116, -inf
        %1122 = vmax.xlane.f32.xlu0 %v1121
        %v1123 = vpop.xlane.xlu0 %1122
        %v1124 = vsub.f32 %v1116, %v1123
        %v1125 = vmul.f32 %v1124, 1.442695
        %v1126 = vpow.pop %v1125
        %v1127 = vsel %vm1011, %v1126, 0.0
        %1128 = vadd.xlane.f32.xlu0 %v1127
        %v1129 = vpop.xlane.xlu0 %1128
        %v1130 = vrcp.pop %v1129
        %v1131 = vmul.f32 %v1126, %v1130
        %v1132 = vpack.c.bf16 %v1131, %v1131
        %1134 = vrot.lane.b32.xlu0 %v1024, 120
        %v1135 = vpop.permute.xlu0 %1134
        %v1138 = vsel %vm1011, %v1132, 0
        %1140 = vmatprep.subr.bf16.mxu0 0
        %1141 = vmatpush1.bf16.msra.mxu0 0
        %1142 = vmatprep.subr.bf16.mxu0 0
        %1143 = vmatpush1.bf16.msra.mxu0 0
        %1144 = vmatprep.subr.bf16.mxu0 0
        %1145 = vmatpush1.bf16.msra.mxu0 0
        %1146 = vmatprep.subr.bf16.mxu0 0
        %1147 = vmatpush1.bf16.msra.mxu0 0
        %1148 = vmatprep.subr.bf16.mxu0 0
        %1149 = vmatpush1.bf16.msra.mxu0 0
        %1150 = vmatprep.subr.bf16.mxu0 0
        %1151 = vmatpush1.bf16.msra.mxu0 0
        %1152 = vmatprep.subr.bf16.mxu0 0
        %1153 = vmatpush1.bf16.msra.mxu0 0
        %1154 = vmatprep.subr.bf16.mxu0 0
        %1155 = vmatpush1.bf16.msra.mxu0 %v1135
        %1156 = vmatprep.subr.bf16.mxu0 0
        %1157 = vmatpush2.bf16.msra.mxu0 0
        %1158 = vmatprep.subr.bf16.mxu0 0
        %1159 = vmatpush2.bf16.msra.mxu0 0
        %1160 = vmatprep.subr.bf16.mxu0 0
        %1161 = vmatpush2.bf16.msra.mxu0 0
        %1162 = vmatprep.subr.bf16.mxu0 0
        %1163 = vmatpush2.bf16.msra.mxu0 0
        %1164 = vmatprep.subr.bf16.mxu0 0
        %1165 = vmatpush2.bf16.msra.mxu0 0
        %1166 = vmatprep.subr.bf16.mxu0 0
        %1167 = vmatpush2.bf16.msra.mxu0 0
        %1168 = vmatprep.subr.bf16.mxu0 0
        %1169 = vmatpush2.bf16.msra.mxu0 0
        %1170 = vmatprep.subr.bf16.mxu0 0
        %1171 = vmatpush2.bf16.msra.mxu0 0
        %1172 = vmatprep.mubr.bf16.mxu0 0
        %1173 = vmatmul.mubr.bf16.gmra.mxu0 %v1138
        %v1174 = vpop.f32.mrf.mxu0
        %v1175 = vadd.f32 0.0, %v1174
        %v1176 = vpop.f32.mrf.mxu0
        %v1177 = vpop.f32.mrf.mxu0
        %v1178 = vpop.f32.mrf.mxu0
        %1179 = vdwg.mxu0
        %v1180 = vld [vmem:[#allocation10 + $0x8] sm:$0xff]
        %v1181 = vpack.c.bf16 %v1175, %v1175
        %v1182 = vpack.c.bf16 %v1180, %v1180
        %v1184 = vsel %vm963, %v1181, 0
        %v1187 = vsel %vm967, %v1182, 0
        %1189 = vmatprep.subr.bf16.mxu0 0
        %1190 = vmatpush1.bf16.msra.mxu0 0
        %1191 = vmatprep.subr.bf16.mxu0 0
        %1192 = vmatpush1.bf16.msra.mxu0 0
        %1193 = vmatprep.subr.bf16.mxu0 0
        %1194 = vmatpush1.bf16.msra.mxu0 0
        %1195 = vmatprep.subr.bf16.mxu0 0
        %1196 = vmatpush1.bf16.msra.mxu0 0
        %1197 = vmatprep.subr.bf16.mxu0 0
        %1198 = vmatpush1.bf16.msra.mxu0 0
        %1199 = vmatprep.subr.bf16.mxu0 0
        %1200 = vmatpush1.bf16.msra.mxu0 0
        %1201 = vmatprep.subr.bf16.mxu0 0
        %1202 = vmatpush1.bf16.msra.mxu0 0
        %1203 = vmatprep.subr.bf16.mxu0 0
        %1204 = vmatpush1.bf16.msra.mxu0 %v1187
        %1205 = vmatprep.subr.bf16.mxu0 0
        %1206 = vmatpush2.bf16.msra.mxu0 0
        %1207 = vmatprep.subr.bf16.mxu0 0
        %1208 = vmatpush2.bf16.msra.mxu0 0
        %1209 = vmatprep.subr.bf16.mxu0 0
        %1210 = vmatpush2.bf16.msra.mxu0 0
        %1211 = vmatprep.subr.bf16.mxu0 0
        %1212 = vmatpush2.bf16.msra.mxu0 0
        %1213 = vmatprep.subr.bf16.mxu0 0
        %1214 = vmatpush2.bf16.msra.mxu0 0
        %1215 = vmatprep.subr.bf16.mxu0 0
        %1216 = vmatpush2.bf16.msra.mxu0 0
        %1217 = vmatprep.subr.bf16.mxu0 0
        %1218 = vmatpush2.bf16.msra.mxu0 0
        %1219 = vmatprep.subr.bf16.mxu0 0
        %1220 = vmatpush2.bf16.msra.mxu0 0
        %1221 = vmatprep.mubr.bf16.mxu0 0
        %1222 = vmatmul.mubr.bf16.gmra.mxu0 %v1184
        %v1223 = vpop.f32.mrf.mxu0
        %v1224 = vadd.f32 0.0, %v1223
        %v1225 = vpop.f32.mrf.mxu0
        %v1226 = vpop.f32.mrf.mxu0
        %v1227 = vpop.f32.mrf.mxu0
        %1228 = vdwg.mxu0
        %v1230 = vsel %vm963, %v1069, 0
        %v1233 = vsel %vm967, %v1070, 0
        %1235 = vmatprep.subr.bf16.mxu0 0
        %1236 = vmatpush1.bf16.msra.mxu0 0
        %1237 = vmatprep.subr.bf16.mxu0 0
        %1238 = vmatpush1.bf16.msra.mxu0 0
        %1239 = vmatprep.subr.bf16.mxu0 0
        %1240 = vmatpush1.bf16.msra.mxu0 0
        %1241 = vmatprep.subr.bf16.mxu0 0
        %1242 = vmatpush1.bf16.msra.mxu0 0
        %1243 = vmatprep.subr.bf16.mxu0 0
        %1244 = vmatpush1.bf16.msra.mxu0 0
        %1245 = vmatprep.subr.bf16.mxu0 0
        %1246 = vmatpush1.bf16.msra.mxu0 0
        %1247 = vmatprep.subr.bf16.mxu0 0
        %1248 = vmatpush1.bf16.msra.mxu0 0
        %1249 = vmatprep.subr.bf16.mxu0 0
        %1250 = vmatpush1.bf16.msra.mxu0 %v1233
        %1251 = vmatprep.subr.bf16.mxu0 0
        %1252 = vmatpush2.bf16.msra.mxu0 0
        %1253 = vmatprep.subr.bf16.mxu0 0
        %1254 = vmatpush2.bf16.msra.mxu0 0
        %1255 = vmatprep.subr.bf16.mxu0 0
        %1256 = vmatpush2.bf16.msra.mxu0 0
        %1257 = vmatprep.subr.bf16.mxu0 0
        %1258 = vmatpush2.bf16.msra.mxu0 0
        %1259 = vmatprep.subr.bf16.mxu0 0
        %1260 = vmatpush2.bf16.msra.mxu0 0
        %1261 = vmatprep.subr.bf16.mxu0 0
        %1262 = vmatpush2.bf16.msra.mxu0 0
        %1263 = vmatprep.subr.bf16.mxu0 0
        %1264 = vmatpush2.bf16.msra.mxu0 0
        %1265 = vmatprep.subr.bf16.mxu0 0
        %1266 = vmatpush2.bf16.msra.mxu0 0
        %1267 = vmatprep.mubr.bf16.mxu0 0
        %1268 = vmatmul.mubr.bf16.gmra.mxu0 %v1230
        %v1269 = vpop.f32.mrf.mxu0
        %v1270 = vadd.f32 %v1224, %v1269
        %v1271 = vpop.f32.mrf.mxu0
        %v1272 = vpop.f32.mrf.mxu0
        %v1273 = vpop.f32.mrf.mxu0
        %1274 = vdwg.mxu0
        %v1275 = vpack.c.bf16 %v898, %v898
        %1276 = vrot.lane.b32.xlu0 %v961, 112
        %v1277 = vpop.permute.xlu0 %1276
        %v1279 = vsel %vm963, %v1277, 0
        %v1282 = vsel %vm967, %v1275, 0
        %1284 = vmatprep.subr.bf16.mxu0 0
        %1285 = vmatpush1.bf16.msra.mxu0 0
        %1286 = vmatprep.subr.bf16.mxu0 0
        %1287 = vmatpush1.bf16.msra.mxu0 0
        %1288 = vmatprep.subr.bf16.mxu0 0
        %1289 = vmatpush1.bf16.msra.mxu0 0
        %1290 = vmatprep.subr.bf16.mxu0 0
        %1291 = vmatpush1.bf16.msra.mxu0 0
        %1292 = vmatprep.subr.bf16.mxu0 0
        %1293 = vmatpush1.bf16.msra.mxu0 0
        %1294 = vmatprep.subr.bf16.mxu0 0
        %1295 = vmatpush1.bf16.msra.mxu0 0
        %1296 = vmatprep.subr.bf16.mxu0 0
        %1297 = vmatpush1.bf16.msra.mxu0 0
        %1298 = vmatprep.subr.bf16.mxu0 0
        %1299 = vmatpush1.bf16.msra.mxu0 %v1282
        %1300 = vmatprep.subr.bf16.mxu0 0
        %1301 = vmatpush2.bf16.msra.mxu0 0
        %1302 = vmatprep.subr.bf16.mxu0 0
        %1303 = vmatpush2.bf16.msra.mxu0 0
        %1304 = vmatprep.subr.bf16.mxu0 0
        %1305 = vmatpush2.bf16.msra.mxu0 0
        %1306 = vmatprep.subr.bf16.mxu0 0
        %1307 = vmatpush2.bf16.msra.mxu0 0
        %1308 = vmatprep.subr.bf16.mxu0 0
        %1309 = vmatpush2.bf16.msra.mxu0 0
        %1310 = vmatprep.subr.bf16.mxu0 0
        %1311 = vmatpush2.bf16.msra.mxu0 0
        %1312 = vmatprep.subr.bf16.mxu0 0
        %1313 = vmatpush2.bf16.msra.mxu0 0
        %1314 = vmatprep.subr.bf16.mxu0 0
        %1315 = vmatpush2.bf16.msra.mxu0 0
        %1316 = vmatprep.mubr.bf16.mxu0 0
        %1317 = vmatmul.mubr.bf16.gmra.mxu0 %v1279
        %v1318 = vpop.f32.mrf.mxu0
        %v1319 = vadd.f32 0.0, %v1318
        %v1320 = vpop.f32.mrf.mxu0
        %v1321 = vpop.f32.mrf.mxu0
        %v1322 = vpop.f32.mrf.mxu0
        %1323 = vdwg.mxu0
        %v1324 = vsel %vm1011, %v1319, -inf
        %1325 = vmax.xlane.f32.xlu0 %v1324
        %v1326 = vpop.xlane.xlu0 %1325
        %v1327 = vsub.f32 %v1319, %v1326
        %v1328 = vmul.f32 %v1327, 1.442695
        %v1329 = vpow.pop %v1328
        %v1330 = vsel %vm1011, %v1329, 0.0
        %1331 = vadd.xlane.f32.xlu0 %v1330
        %v1332 = vpop.xlane.xlu0 %1331
        %v1333 = vrcp.pop %v1332
        %v1334 = vmul.f32 %v1329, %v1333
        %v1335 = vpack.c.bf16 %v1334, %v1334
        %1336 = vrot.lane.b32.xlu0 %v1024, 112
        %v1337 = vpop.permute.xlu0 %1336
        %v1340 = vsel %vm1011, %v1335, 0
        %1342 = vmatprep.subr.bf16.mxu0 0
        %1343 = vmatpush1.bf16.msra.mxu0 0
        %1344 = vmatprep.subr.bf16.mxu0 0
        %1345 = vmatpush1.bf16.msra.mxu0 0
        %1346 = vmatprep.subr.bf16.mxu0 0
        %1347 = vmatpush1.bf16.msra.mxu0 0
        %1348 = vmatprep.subr.bf16.mxu0 0
        %1349 = vmatpush1.bf16.msra.mxu0 0
        %1350 = vmatprep.subr.bf16.mxu0 0
        %1351 = vmatpush1.bf16.msra.mxu0 0
        %1352 = vmatprep.subr.bf16.mxu0 0
        %1353 = vmatpush1.bf16.msra.mxu0 0
        %1354 = vmatprep.subr.bf16.mxu0 0
        %1355 = vmatpush1.bf16.msra.mxu0 0
        %1356 = vmatprep.subr.bf16.mxu0 0
        %1357 = vmatpush1.bf16.msra.mxu0 %v1337
        %1358 = vmatprep.subr.bf16.mxu0 0
        %1359 = vmatpush2.bf16.msra.mxu0 0
        %1360 = vmatprep.subr.bf16.mxu0 0
        %1361 = vmatpush2.bf16.msra.mxu0 0
        %1362 = vmatprep.subr.bf16.mxu0 0
        %1363 = vmatpush2.bf16.msra.mxu0 0
        %1364 = vmatprep.subr.bf16.mxu0 0
        %1365 = vmatpush2.bf16.msra.mxu0 0
        %1366 = vmatprep.subr.bf16.mxu0 0
        %1367 = vmatpush2.bf16.msra.mxu0 0
        %1368 = vmatprep.subr.bf16.mxu0 0
        %1369 = vmatpush2.bf16.msra.mxu0 0
        %1370 = vmatprep.subr.bf16.mxu0 0
        %1371 = vmatpush2.bf16.msra.mxu0 0
        %1372 = vmatprep.subr.bf16.mxu0 0
        %1373 = vmatpush2.bf16.msra.mxu0 0
        %1374 = vmatprep.mubr.bf16.mxu0 0
        %1375 = vmatmul.mubr.bf16.gmra.mxu0 %v1340
        %v1376 = vpop.f32.mrf.mxu0
        %v1377 = vadd.f32 0.0, %v1376
        %v1378 = vpop.f32.mrf.mxu0
        %v1379 = vpop.f32.mrf.mxu0
        %v1380 = vpop.f32.mrf.mxu0
        %1381 = vdwg.mxu0
        %v1382 = vld [vmem:[#allocation10 + $0x10] sm:$0xff]
        %v1383 = vpack.c.bf16 %v1377, %v1377
        %v1384 = vpack.c.bf16 %v1382, %v1382
        %v1386 = vsel %vm963, %v1383, 0
        %v1389 = vsel %vm967, %v1384, 0
        %1391 = vmatprep.subr.bf16.mxu0 0
        %1392 = vmatpush1.bf16.msra.mxu0 0
        %1393 = vmatprep.subr.bf16.mxu0 0
        %1394 = vmatpush1.bf16.msra.mxu0 0
        %1395 = vmatprep.subr.bf16.mxu0 0
        %1396 = vmatpush1.bf16.msra.mxu0 0
        %1397 = vmatprep.subr.bf16.mxu0 0
        %1398 = vmatpush1.bf16.msra.mxu0 0
        %1399 = vmatprep.subr.bf16.mxu0 0
        %1400 = vmatpush1.bf16.msra.mxu0 0
        %1401 = vmatprep.subr.bf16.mxu0 0
        %1402 = vmatpush1.bf16.msra.mxu0 0
        %1403 = vmatprep.subr.bf16.mxu0 0
        %1404 = vmatpush1.bf16.msra.mxu0 0
        %1405 = vmatprep.subr.bf16.mxu0 0
        %1406 = vmatpush1.bf16.msra.mxu0 %v1389
        %1407 = vmatprep.subr.bf16.mxu0 0
        %1408 = vmatpush2.bf16.msra.mxu0 0
        %1409 = vmatprep.subr.bf16.mxu0 0
        %1410 = vmatpush2.bf16.msra.mxu0 0
        %1411 = vmatprep.subr.bf16.mxu0 0
        %1412 = vmatpush2.bf16.msra.mxu0 0
        %1413 = vmatprep.subr.bf16.mxu0 0
        %1414 = vmatpush2.bf16.msra.mxu0 0
        %1415 = vmatprep.subr.bf16.mxu0 0
        %1416 = vmatpush2.bf16.msra.mxu0 0
        %1417 = vmatprep.subr.bf16.mxu0 0
        %1418 = vmatpush2.bf16.msra.mxu0 0
        %1419 = vmatprep.subr.bf16.mxu0 0
        %1420 = vmatpush2.bf16.msra.mxu0 0
        %1421 = vmatprep.subr.bf16.mxu0 0
        %1422 = vmatpush2.bf16.msra.mxu0 0
        %1423 = vmatprep.mubr.bf16.mxu0 0
        %1424 = vmatmul.mubr.bf16.gmra.mxu0 %v1386
        %v1425 = vpop.f32.mrf.mxu0
        %v1426 = vadd.f32 0.0, %v1425
        %v1427 = vpop.f32.mrf.mxu0
        %v1428 = vpop.f32.mrf.mxu0
        %v1429 = vpop.f32.mrf.mxu0
        %1430 = vdwg.mxu0
        %v1431 = vadd.f32 %v1270, %v1426
        %v1432 = vpack.c.bf16 %v899, %v899
        %1433 = vrot.lane.b32.xlu0 %v961, 104
        %v1434 = vpop.permute.xlu0 %1433
        %v1436 = vsel %vm963, %v1434, 0
        %v1439 = vsel %vm967, %v1432, 0
        %1441 = vmatprep.subr.bf16.mxu0 0
        %1442 = vmatpush1.bf16.msra.mxu0 0
        %1443 = vmatprep.subr.bf16.mxu0 0
        %1444 = vmatpush1.bf16.msra.mxu0 0
        %1445 = vmatprep.subr.bf16.mxu0 0
        %1446 = vmatpush1.bf16.msra.mxu0 0
        %1447 = vmatprep.subr.bf16.mxu0 0
        %1448 = vmatpush1.bf16.msra.mxu0 0
        %1449 = vmatprep.subr.bf16.mxu0 0
        %1450 = vmatpush1.bf16.msra.mxu0 0
        %1451 = vmatprep.subr.bf16.mxu0 0
        %1452 = vmatpush1.bf16.msra.mxu0 0
        %1453 = vmatprep.subr.bf16.mxu0 0
        %1454 = vmatpush1.bf16.msra.mxu0 0
        %1455 = vmatprep.subr.bf16.mxu0 0
        %1456 = vmatpush1.bf16.msra.mxu0 %v1439
        %1457 = vmatprep.subr.bf16.mxu0 0
        %1458 = vmatpush2.bf16.msra.mxu0 0
        %1459 = vmatprep.subr.bf16.mxu0 0
        %1460 = vmatpush2.bf16.msra.mxu0 0
        %1461 = vmatprep.subr.bf16.mxu0 0
        %1462 = vmatpush2.bf16.msra.mxu0 0
        %1463 = vmatprep.subr.bf16.mxu0 0
        %1464 = vmatpush2.bf16.msra.mxu0 0
        %1465 = vmatprep.subr.bf16.mxu0 0
        %1466 = vmatpush2.bf16.msra.mxu0 0
        %1467 = vmatprep.subr.bf16.mxu0 0
        %1468 = vmatpush2.bf16.msra.mxu0 0
        %1469 = vmatprep.subr.bf16.mxu0 0
        %1470 = vmatpush2.bf16.msra.mxu0 0
        %1471 = vmatprep.subr.bf16.mxu0 0
        %1472 = vmatpush2.bf16.msra.mxu0 0
        %1473 = vmatprep.mubr.bf16.mxu0 0
        %1474 = vmatmul.mubr.bf16.gmra.mxu0 %v1436
        %v1475 = vpop.f32.mrf.mxu0
        %v1476 = vadd.f32 0.0, %v1475
        %v1477 = vpop.f32.mrf.mxu0
        %v1478 = vpop.f32.mrf.mxu0
        %v1479 = vpop.f32.mrf.mxu0
        %1480 = vdwg.mxu0
        %v1481 = vsel %vm1011, %v1476, -inf
        %1482 = vmax.xlane.f32.xlu0 %v1481
        %v1483 = vpop.xlane.xlu0 %1482
        %v1484 = vsub.f32 %v1476, %v1483
        %v1485 = vmul.f32 %v1484, 1.442695
        %v1486 = vpow.pop %v1485
        %v1487 = vsel %vm1011, %v1486, 0.0
        %1488 = vadd.xlane.f32.xlu0 %v1487
        %v1489 = vpop.xlane.xlu0 %1488
        %v1490 = vrcp.pop %v1489
        %v1491 = vmul.f32 %v1486, %v1490
        %v1492 = vpack.c.bf16 %v1491, %v1491
        %1493 = vrot.lane.b32.xlu0 %v1024, 104
        %v1494 = vpop.permute.xlu0 %1493
        %v1497 = vsel %vm1011, %v1492, 0
        %1499 = vmatprep.subr.bf16.mxu0 0
        %1500 = vmatpush1.bf16.msra.mxu0 0
        %1501 = vmatprep.subr.bf16.mxu0 0
        %1502 = vmatpush1.bf16.msra.mxu0 0
        %1503 = vmatprep.subr.bf16.mxu0 0
        %1504 = vmatpush1.bf16.msra.mxu0 0
        %1505 = vmatprep.subr.bf16.mxu0 0
        %1506 = vmatpush1.bf16.msra.mxu0 0
        %1507 = vmatprep.subr.bf16.mxu0 0
        %1508 = vmatpush1.bf16.msra.mxu0 0
        %1509 = vmatprep.subr.bf16.mxu0 0
        %1510 = vmatpush1.bf16.msra.mxu0 0
        %1511 = vmatprep.subr.bf16.mxu0 0
        %1512 = vmatpush1.bf16.msra.mxu0 0
        %1513 = vmatprep.subr.bf16.mxu0 0
        %1514 = vmatpush1.bf16.msra.mxu0 %v1494
        %1515 = vmatprep.subr.bf16.mxu0 0
        %1516 = vmatpush2.bf16.msra.mxu0 0
        %1517 = vmatprep.subr.bf16.mxu0 0
        %1518 = vmatpush2.bf16.msra.mxu0 0
        %1519 = vmatprep.subr.bf16.mxu0 0
        %1520 = vmatpush2.bf16.msra.mxu0 0
        %1521 = vmatprep.subr.bf16.mxu0 0
        %1522 = vmatpush2.bf16.msra.mxu0 0
        %1523 = vmatprep.subr.bf16.mxu0 0
        %1524 = vmatpush2.bf16.msra.mxu0 0
        %1525 = vmatprep.subr.bf16.mxu0 0
        %1526 = vmatpush2.bf16.msra.mxu0 0
        %1527 = vmatprep.subr.bf16.mxu0 0
        %1528 = vmatpush2.bf16.msra.mxu0 0
        %1529 = vmatprep.subr.bf16.mxu0 0
        %1530 = vmatpush2.bf16.msra.mxu0 0
        %1531 = vmatprep.mubr.bf16.mxu0 0
        %1532 = vmatmul.mubr.bf16.gmra.mxu0 %v1497
        %v1533 = vpop.f32.mrf.mxu0
        %v1534 = vadd.f32 0.0, %v1533
        %v1535 = vpop.f32.mrf.mxu0
        %v1536 = vpop.f32.mrf.mxu0
        %v1537 = vpop.f32.mrf.mxu0
        %1538 = vdwg.mxu0
        %v1539 = vld [vmem:[#allocation10 + $0x18] sm:$0xff]
        %v1540 = vpack.c.bf16 %v1534, %v1534
        %v1541 = vpack.c.bf16 %v1539, %v1539
        %v1543 = vsel %vm963, %v1540, 0
        %v1546 = vsel %vm967, %v1541, 0
        %1548 = vmatprep.subr.bf16.mxu0 0
        %1549 = vmatpush1.bf16.msra.mxu0 0
        %1550 = vmatprep.subr.bf16.mxu0 0
        %1551 = vmatpush1.bf16.msra.mxu0 0
        %1552 = vmatprep.subr.bf16.mxu0 0
        %1553 = vmatpush1.bf16.msra.mxu0 0
        %1554 = vmatprep.subr.bf16.mxu0 0
        %1555 = vmatpush1.bf16.msra.mxu0 0
        %1556 = vmatprep.subr.bf16.mxu0 0
        %1557 = vmatpush1.bf16.msra.mxu0 0
        %1558 = vmatprep.subr.bf16.mxu0 0
        %1559 = vmatpush1.bf16.msra.mxu0 0
        %1560 = vmatprep.subr.bf16.mxu0 0
        %1561 = vmatpush1.bf16.msra.mxu0 0
        %1562 = vmatprep.subr.bf16.mxu0 0
        %1563 = vmatpush1.bf16.msra.mxu0 %v1546
        %1564 = vmatprep.subr.bf16.mxu0 0
        %1565 = vmatpush2.bf16.msra.mxu0 0
        %1566 = vmatprep.subr.bf16.mxu0 0
        %1567 = vmatpush2.bf16.msra.mxu0 0
        %1568 = vmatprep.subr.bf16.mxu0 0
        %1569 = vmatpush2.bf16.msra.mxu0 0
        %1570 = vmatprep.subr.bf16.mxu0 0
        %1571 = vmatpush2.bf16.msra.mxu0 0
        %1572 = vmatprep.subr.bf16.mxu0 0
        %1573 = vmatpush2.bf16.msra.mxu0 0
        %1574 = vmatprep.subr.bf16.mxu0 0
        %1575 = vmatpush2.bf16.msra.mxu0 0
        %1576 = vmatprep.subr.bf16.mxu0 0
        %1577 = vmatpush2.bf16.msra.mxu0 0
        %1578 = vmatprep.subr.bf16.mxu0 0
        %1579 = vmatpush2.bf16.msra.mxu0 0
        %1580 = vmatprep.mubr.bf16.mxu0 0
        %1581 = vmatmul.mubr.bf16.gmra.mxu0 %v1543
        %v1582 = vpop.f32.mrf.mxu0
        %v1583 = vadd.f32 0.0, %v1582
        %v1584 = vpop.f32.mrf.mxu0
        %v1585 = vpop.f32.mrf.mxu0
        %v1586 = vpop.f32.mrf.mxu0
        %1587 = vdwg.mxu0
        %v1588 = vadd.f32 %v1431, %v1583
        %v1589 = vadd.f32 %v894, %v1588
        %v1590 = vld [vmem:[#allocation11] sm:$0x1]
        %v1592 = vlaneseq
        %v1593 = vshrl.u32 %v1592, 7
        %v1594 = vsub.s32 0, %v1593
        %v1595 = vrot.slane %v1590, %v1594
        %v1597 = vadd.f32 %v1589, %v1595
        %1598 = vst.msk [vmem:[%s864] sm:$0xff] %vm916, %v1597
        %v1599 = vld [vmem:[#allocation13] sm:$0x1]
        %v1600 = vld [vmem:[#allocation14] sm:$0x1]
        %v1601 = vsel %vm916, %v1597, 0.0
        %1602 = vadd.xlane.f32.xlu0 %v1601
        %v1603 = vpop.xlane.xlu0 %1602
        %v1604 = vrcp.pop 32.0
        %v1605 = vmul.f32 %v1603, %v1604
        %v1606 = vsub.f32 %v1597, %v1605
        %v1607 = vmul.f32 %v1606, %v1606
        %v1608 = vsel %vm916, %v1607, 0.0
        %1609 = vadd.xlane.f32.xlu0 %v1608
        %v1610 = vpop.xlane.xlu0 %1609
        %v1611 = vmul.f32 %v1610, %v1604
        %v1612 = vadd.f32 %v1611, 1e-05
        %v1613 = vrsqrt.pop %v1612
        %v1614 = vmul.f32 %v1606, %v1613
        %v1616 = vlaneseq
        %v1617 = vshrl.u32 %v1616, 7
        %v1618 = vsub.s32 0, %v1617
        %v1619 = vrot.slane %v1599, %v1618
        %v1621 = vmul.f32 %v1614, %v1619
        %v1623 = vlaneseq
        %v1624 = vshrl.u32 %v1623, 7
        %v1625 = vsub.s32 0, %v1624
        %v1626 = vrot.slane %v1600, %v1625
        %v1628 = vadd.f32 %v1621, %v1626
        %v1629 = vld [vmem:[%s10] sm:$0xff]
        %v1630 = vld [vmem:[%s10 + $0x8] sm:$0xff]
        %v1631 = vld [vmem:[%s10 + $0x10] sm:$0xff]
        %v1632 = vld [vmem:[%s10 + $0x18] sm:$0xff]
        %v1633 = vpack.c.bf16 %v1628, %v1628
        %v1634 = vpack.c.bf16 %v1630, %v1629
        %v1635 = vpack.c.bf16 %v1632, %v1631
        %v1636 = vld [vmem:[%s11] sm:$0x1]
        %v1638 = vlaneseq
        %v1639 = vshrl.u32 %v1638, 7
        %v1640 = vsub.s32 0, %v1639
        %v1641 = vrot.slane %v1636, %v1640
        %v1644 = vsel %vm916, %v1633, 0
        %1646 = vmatprep.subr.bf16.mxu0 0
        %1647 = vmatpush1.bf16.msra.mxu0 0
        %1648 = vmatprep.subr.bf16.mxu0 0
        %1649 = vmatpush1.bf16.msra.mxu0 0
        %1650 = vmatprep.subr.bf16.mxu0 0
        %1651 = vmatpush1.bf16.msra.mxu0 0
        %1652 = vmatprep.subr.bf16.mxu0 0
        %1653 = vmatpush1.bf16.msra.mxu0 0
        %1654 = vmatprep.subr.bf16.mxu0 0
        %1655 = vmatpush1.bf16.msra.mxu0 0
        %1656 = vmatprep.subr.bf16.mxu0 0
        %1657 = vmatpush1.bf16.msra.mxu0 0
        %1658 = vmatprep.subr.bf16.mxu0 0
        %1659 = vmatpush1.bf16.msra.mxu0 %v1635
        %1660 = vmatprep.subr.bf16.mxu0 0
        %1661 = vmatpush1.bf16.msra.mxu0 %v1634
        %1662 = vmatprep.subr.bf16.mxu0 0
        %1663 = vmatpush2.bf16.msra.mxu0 0
        %1664 = vmatprep.subr.bf16.mxu0 0
        %1665 = vmatpush2.bf16.msra.mxu0 0
        %1666 = vmatprep.subr.bf16.mxu0 0
        %1667 = vmatpush2.bf16.msra.mxu0 0
        %1668 = vmatprep.subr.bf16.mxu0 0
        %1669 = vmatpush2.bf16.msra.mxu0 0
        %1670 = vmatprep.subr.bf16.mxu0 0
        %1671 = vmatpush2.bf16.msra.mxu0 0
        %1672 = vmatprep.subr.bf16.mxu0 0
        %1673 = vmatpush2.bf16.msra.mxu0 0
        %1674 = vmatprep.subr.bf16.mxu0 0
        %1675 = vmatpush2.bf16.msra.mxu0 0
        %1676 = vmatprep.subr.bf16.mxu0 0
        %1677 = vmatpush2.bf16.msra.mxu0 0
        %1678 = vmatprep.mubr.bf16.mxu0 0
        %1679 = vmatmul.mubr.bf16.gmra.mxu0 %v1644
        %v1680 = vpop.f32.mrf.mxu0
        %v1681 = vadd.f32 %v1641, %v1680
        %v1682 = vpop.f32.mrf.mxu0
        %v1683 = vpop.f32.mrf.mxu0
        %v1684 = vpop.f32.mrf.mxu0
        %1685 = vdwg.mxu0
        %v1686 = vmul.f32 %v1681, 0.17677669
        %1687 = vst [vmem:[%s871] sm:$0xff] %v1686
        %v1688 = vld [vmem:[#allocation16] sm:$0xff]
        %v1689 = vld [vmem:[#allocation16 + $0x8] sm:$0xff]
        %v1690 = vld [vmem:[#allocation16 + $0x10] sm:$0xff]
        %v1691 = vld [vmem:[#allocation16 + $0x18] sm:$0xff]
        %v1692 = vpack.c.bf16 %v1689, %v1688
        %v1693 = vpack.c.bf16 %v1691, %v1690
        %v1694 = vld [vmem:[%s13] sm:$0x1]
        %v1696 = vlaneseq
        %v1697 = vshrl.u32 %v1696, 7
        %v1698 = vsub.s32 0, %v1697
        %v1699 = vrot.slane %v1694, %v1698
        %1701 = vmatprep.subr.bf16.mxu0 0
        %1702 = vmatpush1.bf16.msra.mxu0 0
        %1703 = vmatprep.subr.bf16.mxu0 0
        %1704 = vmatpush1.bf16.msra.mxu0 0
        %1705 = vmatprep.subr.bf16.mxu0 0
        %1706 = vmatpush1.bf16.msra.mxu0 0
        %1707 = vmatprep.subr.bf16.mxu0 0
        %1708 = vmatpush1.bf16.msra.mxu0 0
        %1709 = vmatprep.subr.bf16.mxu0 0
        %1710 = vmatpush1.bf16.msra.mxu0 0
        %1711 = vmatprep.subr.bf16.mxu0 0
        %1712 = vmatpush1.bf16.msra.mxu0 0
        %1713 = vmatprep.subr.bf16.mxu0 0
        %1714 = vmatpush1.bf16.msra.mxu0 %v1693
        %1715 = vmatprep.subr.bf16.mxu0 0
        %1716 = vmatpush1.bf16.msra.mxu0 %v1692
        %1717 = vmatprep.subr.bf16.mxu0 0
        %1718 = vmatpush2.bf16.msra.mxu0 0
        %1719 = vmatprep.subr.bf16.mxu0 0
        %1720 = vmatpush2.bf16.msra.mxu0 0
        %1721 = vmatprep.subr.bf16.mxu0 0
        %1722 = vmatpush2.bf16.msra.mxu0 0
        %1723 = vmatprep.subr.bf16.mxu0 0
        %1724 = vmatpush2.bf16.msra.mxu0 0
        %1725 = vmatprep.subr.bf16.mxu0 0
        %1726 = vmatpush2.bf16.msra.mxu0 0
        %1727 = vmatprep.subr.bf16.mxu0 0
        %1728 = vmatpush2.bf16.msra.mxu0 0
        %1729 = vmatprep.subr.bf16.mxu0 0
        %1730 = vmatpush2.bf16.msra.mxu0 0
        %1731 = vmatprep.subr.bf16.mxu0 0
        %1732 = vmatpush2.bf16.msra.mxu0 0
        %1733 = vmatprep.mubr.bf16.mxu0 0
        %1734 = vmatmul.mubr.bf16.gmra.mxu0 %v1644
        %v1735 = vpop.f32.mrf.mxu0
        %v1736 = vadd.f32 %v1699, %v1735
        %v1737 = vpop.f32.mrf.mxu0
        %v1738 = vpop.f32.mrf.mxu0
        %v1739 = vpop.f32.mrf.mxu0
        %1740 = vdwg.mxu0
        %1741 = vst [vmem:[%s878] sm:$0xff] %v1736
        %v1742 = vld [vmem:[#allocation17] sm:$0xff]
        %v1743 = vld [vmem:[#allocation17 + $0x8] sm:$0xff]
        %v1744 = vld [vmem:[#allocation17 + $0x10] sm:$0xff]
        %v1745 = vld [vmem:[#allocation17 + $0x18] sm:$0xff]
        %v1746 = vpack.c.bf16 %v1743, %v1742
        %v1747 = vpack.c.bf16 %v1745, %v1744
        %v1748 = vld [vmem:[%s15] sm:$0x1]
        %v1750 = vlaneseq
        %v1751 = vshrl.u32 %v1750, 7
        %v1752 = vsub.s32 0, %v1751
        %v1753 = vrot.slane %v1748, %v1752
        %1755 = vmatprep.subr.bf16.mxu0 0
        %1756 = vmatpush1.bf16.msra.mxu0 0
        %1757 = vmatprep.subr.bf16.mxu0 0
        %1758 = vmatpush1.bf16.msra.mxu0 0
        %1759 = vmatprep.subr.bf16.mxu0 0
        %1760 = vmatpush1.bf16.msra.mxu0 0
        %1761 = vmatprep.subr.bf16.mxu0 0
        %1762 = vmatpush1.bf16.msra.mxu0 0
        %1763 = vmatprep.subr.bf16.mxu0 0
        %1764 = vmatpush1.bf16.msra.mxu0 0
        %1765 = vmatprep.subr.bf16.mxu0 0
        %1766 = vmatpush1.bf16.msra.mxu0 0
        %1767 = vmatprep.subr.bf16.mxu0 0
        %1768 = vmatpush1.bf16.msra.mxu0 %v1747
        %1769 = vmatprep.subr.bf16.mxu0 0
        %1770 = vmatpush1.bf16.msra.mxu0 %v1746
        %1771 = vmatprep.subr.bf16.mxu0 0
        %1772 = vmatpush2.bf16.msra.mxu0 0
        %1773 = vmatprep.subr.bf16.mxu0 0
        %1774 = vmatpush2.bf16.msra.mxu0 0
        %1775 = vmatprep.subr.bf16.mxu0 0
        %1776 = vmatpush2.bf16.msra.mxu0 0
        %1777 = vmatprep.subr.bf16.mxu0 0
        %1778 = vmatpush2.bf16.msra.mxu0 0
        %1779 = vmatprep.subr.bf16.mxu0 0
        %1780 = vmatpush2.bf16.msra.mxu0 0
        %1781 = vmatprep.subr.bf16.mxu0 0
        %1782 = vmatpush2.bf16.msra.mxu0 0
        %1783 = vmatprep.subr.bf16.mxu0 0
        %1784 = vmatpush2.bf16.msra.mxu0 0
        %1785 = vmatprep.subr.bf16.mxu0 0
        %1786 = vmatpush2.bf16.msra.mxu0 0
        %1787 = vmatprep.mubr.bf16.mxu0 0
        %1788 = vmatmul.mubr.bf16.gmra.mxu0 %v1644
        %v1789 = vpop.f32.mrf.mxu0
        %v1790 = vadd.f32 %v1753, %v1789
        %v1791 = vpop.f32.mrf.mxu0
        %v1792 = vpop.f32.mrf.mxu0
        %v1793 = vpop.f32.mrf.mxu0
        %1794 = vdwg.mxu0
        %1795 = vst [vmem:[%s885] sm:$0xff] %v1790
        %v1796 = vld [vmem:[#allocation19] sm:$0xff]
        %v1797 = vld [vmem:[#allocation19 + $0x8] sm:$0xff]
        %v1798 = vld [vmem:[#allocation19 + $0x10] sm:$0xff]
        %v1799 = vld [vmem:[#allocation19 + $0x18] sm:$0xff]
        %v1800 = vpack.c.bf16 %v1797, %v1796
        %v1801 = vpack.c.bf16 %v1799, %v1798
        %v1802 = vld [vmem:[%s17] sm:$0x1]
        %v1804 = vlaneseq
        %v1805 = vshrl.u32 %v1804, 7
        %v1806 = vsub.s32 0, %v1805
        %v1807 = vrot.slane %v1802, %v1806
        %1809 = vmatprep.subr.bf16.mxu0 0
        %1810 = vmatpush1.bf16.msra.mxu0 0
        %1811 = vmatprep.subr.bf16.mxu0 0
        %1812 = vmatpush1.bf16.msra.mxu0 0
        %1813 = vmatprep.subr.bf16.mxu0 0
        %1814 = vmatpush1.bf16.msra.mxu0 0
        %1815 = vmatprep.subr.bf16.mxu0 0
        %1816 = vmatpush1.bf16.msra.mxu0 0
        %1817 = vmatprep.subr.bf16.mxu0 0
        %1818 = vmatpush1.bf16.msra.mxu0 0
        %1819 = vmatprep.subr.bf16.mxu0 0
        %1820 = vmatpush1.bf16.msra.mxu0 0
        %1821 = vmatprep.subr.bf16.mxu0 0
        %1822 = vmatpush1.bf16.msra.mxu0 %v1801
        %1823 = vmatprep.subr.bf16.mxu0 0
        %1824 = vmatpush1.bf16.msra.mxu0 %v1800
        %1825 = vmatprep.subr.bf16.mxu0 0
        %1826 = vmatpush2.bf16.msra.mxu0 0
        %1827 = vmatprep.subr.bf16.mxu0 0
        %1828 = vmatpush2.bf16.msra.mxu0 0
        %1829 = vmatprep.subr.bf16.mxu0 0
        %1830 = vmatpush2.bf16.msra.mxu0 0
        %1831 = vmatprep.subr.bf16.mxu0 0
        %1832 = vmatpush2.bf16.msra.mxu0 0
        %1833 = vmatprep.subr.bf16.mxu0 0
        %1834 = vmatpush2.bf16.msra.mxu0 0
        %1835 = vmatprep.subr.bf16.mxu0 0
        %1836 = vmatpush2.bf16.msra.mxu0 0
        %1837 = vmatprep.subr.bf16.mxu0 0
        %1838 = vmatpush2.bf16.msra.mxu0 0
        %1839 = vmatprep.subr.bf16.mxu0 0
        %1840 = vmatpush2.bf16.msra.mxu0 0
        %1841 = vmatprep.mubr.bf16.mxu0 0
        %1842 = vmatmul.mubr.bf16.gmra.mxu0 %v1644
        %v1843 = vpop.f32.mrf.mxu0
        %v1844 = vadd.f32 %v1807, %v1843
        %v1845 = vpop.f32.mrf.mxu0
        %v1846 = vpop.f32.mrf.mxu0
        %v1847 = vpop.f32.mrf.mxu0
        %1848 = vdwg.mxu0
        %1849 = vst.msk [vmem:[%s892] sm:$0xff] %vm916, %v1844
        %s1850 = sand.u32 %s449, 1
        %s1851 = scalar_lea.sflag [#allocation4], %s1850
        %s1852 = sand.u32 %s449, 1
        %s1853 = smul.addr %s1852, 8
        %s1854 = scalar_lea.vmem [#allocation20], %s1853
        %s1855 = sand.u32 %s53, 1
        %s1856 = scalar_lea.sflag [#allocation22], %s1855
        %s1857 = sand.u32 %s475, 1
        %s1858 = smul.addr %s1857, 8
        %s1859 = scalar_lea.vmem [#allocation21], %s1858
        %s1860 = sand.u32 %s53, 1
        %s1861 = scalar_lea.sflag [#allocation22], %s1860
        %s1862 = sand.u32 %s501, 1
        %s1863 = smul.addr %s1862, 8
        %s1864 = scalar_lea.vmem [#allocation23], %s1863
        %s1865 = sand.u32 %s53, 1
        %s1866 = scalar_lea.sflag [#allocation25], %s1865
        %s1867 = sand.u32 %s527, 1
        %s1868 = smul.addr %s1867, 8
        %s1869 = scalar_lea.vmem [#allocation24], %s1868
        %s1870 = sand.u32 %s53, 1
        %s1871 = scalar_lea.sflag [#allocation25], %s1870
        %s1872 = sand.u32 %s553, 1
        %s1873 = smul.addr %s1872, 8
        %s1874 = scalar_lea.vmem [#allocation26], %s1873
        // Predicated region
        $region137: #{tpu_custom_call.1} parent=91 // pred_check
          %p1875 = pneg %p459
        $region138: #{tpu_custom_call.1} parent=91 // pred_check_branch
          %1877 = sbr.rel (%p1875) target = $region140
        $region139: #{tpu_custom_call.1} parent=91 // pred_region
          %s1879 = ssub.s32 128, 128
          %1880 = vsyncadd %s1851, %s1879
          %s1881 = smul.addr %s53, 128
          %s1882 = scalar_lea.hbm %s18, %s1881
          %s1884 = sshll.u32 %s1854, 4
          %s1885 = int_to_ptr.vmem [resolvable:$true] %s1884
          %1887 = dma.vmem_to_hbm [thread:$0]  %s1885, 128, %s1882, %s1851
        $region140: #{tpu_custom_call.1} parent=91 // pred_fallthru
          _
        // Predicated region
        $region141: #{tpu_custom_call.1} parent=91 // pred_check
          %p1888 = pneg %p485
        $region142: #{tpu_custom_call.1} parent=91 // pred_check_branch
          %1890 = sbr.rel (%p1888) target = $region144
        $region143: #{tpu_custom_call.1} parent=91 // pred_region
          %s1892 = ssub.s32 128, 128
          %1893 = vsyncadd %s1856, %s1892
          %s1894 = smul.addr %s53, 128
          %s1895 = scalar_lea.hbm %s19, %s1894
          %s1897 = sshll.u32 %s1859, 4
          %s1898 = int_to_ptr.vmem [resolvable:$true] %s1897
          %1900 = dma.vmem_to_hbm [thread:$0]  %s1898, 128, %s1895, %s1856
        $region144: #{tpu_custom_call.1} parent=91 // pred_fallthru
          _
        // Predicated region
        $region145: #{tpu_custom_call.1} parent=91 // pred_check
          %p1901 = pneg %p511
        $region146: #{tpu_custom_call.1} parent=91 // pred_check_branch
          %1903 = sbr.rel (%p1901) target = $region148
        $region147: #{tpu_custom_call.1} parent=91 // pred_region
          %s1905 = ssub.s32 128, 128
          %1906 = vsyncadd %s1861, %s1905
          %s1907 = smul.addr %s53, 128
          %s1908 = scalar_lea.hbm %s20, %s1907
          %s1910 = sshll.u32 %s1864, 4
          %s1911 = int_to_ptr.vmem [resolvable:$true] %s1910
          %1913 = dma.vmem_to_hbm [thread:$0]  %s1911, 128, %s1908, %s1861
        $region148: #{tpu_custom_call.1} parent=91 // pred_fallthru
          _
        // Predicated region
        $region149: #{tpu_custom_call.1} parent=91 // pred_check
          %p1914 = pneg %p537
        $region150: #{tpu_custom_call.1} parent=91 // pred_check_branch
          %1916 = sbr.rel (%p1914) target = $region152
        $region151: #{tpu_custom_call.1} parent=91 // pred_region
          %s1918 = ssub.s32 128, 128
          %1919 = vsyncadd %s1866, %s1918
          %s1920 = smul.addr %s53, 128
          %s1921 = scalar_lea.hbm %s21, %s1920
          %s1923 = sshll.u32 %s1869, 4
          %s1924 = int_to_ptr.vmem [resolvable:$true] %s1923
          %1926 = dma.vmem_to_hbm [thread:$0]  %s1924, 128, %s1921, %s1866
        $region152: #{tpu_custom_call.1} parent=91 // pred_fallthru
          _
        // Predicated region
        $region153: #{tpu_custom_call.1} parent=91 // pred_check
          %p1927 = pneg %p563
        $region154: #{tpu_custom_call.1} parent=91 // pred_check_branch
          %1929 = sbr.rel (%p1927) target = $region156
        $region155: #{tpu_custom_call.1} parent=91 // pred_region
          %s1931 = ssub.s32 128, 128
          %1932 = vsyncadd %s1871, %s1931
          %s1933 = smul.addr %s53, 128
          %s1934 = scalar_lea.hbm %s22, %s1933
          %s1936 = sshll.u32 %s1874, 4
          %s1937 = int_to_ptr.vmem [resolvable:$true] %s1936
          %1939 = dma.vmem_to_hbm [thread:$0]  %s1937, 128, %s1934, %s1871
        $region156: #{tpu_custom_call.1} parent=91 // pred_fallthru
          _
      $region92: #{tpu_custom_call.1} parent=5 // pred_fallthru
        _
      %p1940 = scmp.le.s32.totalorder 2, %s48
      // Predicated region
      $region157: #{tpu_custom_call.1} parent=5 // pred_check
        %p1941 = pneg %p1940
      $region158: #{tpu_custom_call.1} parent=5 // pred_check_branch
        %1943 = sbr.rel (%p1941) target = $region160
      $region159: #{tpu_custom_call.1} parent=5 // pred_region
        %s1944 = ssub.s32 %s48, 2
        // Predicated region
        $region161: #{tpu_custom_call.1} parent=159 // pred_check
          %p1945 = pneg %p465
        $region162: #{tpu_custom_call.1} parent=159 // pred_check_branch
          %1947 = sbr.rel (%p1945) target = $region164
        $region163: #{tpu_custom_call.1} parent=159 // pred_region
          %s1948 = sand.u32 %s450, 1
          %s1949 = scalar_lea.sflag [#allocation4], %s1948
          %s1950 = sand.u32 %s450, 1
          %s1951 = smul.addr %s1950, 8
          %s1952 = scalar_lea.vmem [#allocation20], %s1951
          %1953 = dma.done %s1949, 128
        $region164: #{tpu_custom_call.1} parent=159 // pred_fallthru
          _
        // Predicated region
        $region165: #{tpu_custom_call.1} parent=159 // pred_check
          %p1954 = pneg %p491
        $region166: #{tpu_custom_call.1} parent=159 // pred_check_branch
          %1956 = sbr.rel (%p1954) target = $region168
        $region167: #{tpu_custom_call.1} parent=159 // pred_region
          %s1957 = sand.u32 %s54, 1
          %s1958 = scalar_lea.sflag [#allocation22], %s1957
          %s1959 = sand.u32 %s476, 1
          %s1960 = smul.addr %s1959, 8
          %s1961 = scalar_lea.vmem [#allocation21], %s1960
          %1962 = dma.done %s1958, 128
        $region168: #{tpu_custom_call.1} parent=159 // pred_fallthru
          _
        // Predicated region
        $region169: #{tpu_custom_call.1} parent=159 // pred_check
          %p1963 = pneg %p517
        $region170: #{tpu_custom_call.1} parent=159 // pred_check_branch
          %1965 = sbr.rel (%p1963) target = $region172
        $region171: #{tpu_custom_call.1} parent=159 // pred_region
          %s1966 = sand.u32 %s54, 1
          %s1967 = scalar_lea.sflag [#allocation22], %s1966
          %s1968 = sand.u32 %s502, 1
          %s1969 = smul.addr %s1968, 8
          %s1970 = scalar_lea.vmem [#allocation23], %s1969
          %1971 = dma.done %s1967, 128
        $region172: #{tpu_custom_call.1} parent=159 // pred_fallthru
          _
        // Predicated region
        $region173: #{tpu_custom_call.1} parent=159 // pred_check
          %p1972 = pneg %p543
        $region174: #{tpu_custom_call.1} parent=159 // pred_check_branch
          %1974 = sbr.rel (%p1972) target = $region176
        $region175: #{tpu_custom_call.1} parent=159 // pred_region
          %s1975 = sand.u32 %s54, 1
          %s1976 = scalar_lea.sflag [#allocation25], %s1975
          %s1977 = sand.u32 %s528, 1
          %s1978 = smul.addr %s1977, 8
          %s1979 = scalar_lea.vmem [#allocation24], %s1978
          %1980 = dma.done %s1976, 128
        $region176: #{tpu_custom_call.1} parent=159 // pred_fallthru
          _
        // Predicated region
        $region177: #{tpu_custom_call.1} parent=159 // pred_check
          %p1981 = pneg %p569
        $region178: #{tpu_custom_call.1} parent=159 // pred_check_branch
          %1983 = sbr.rel (%p1981) target = $region180
        $region179: #{tpu_custom_call.1} parent=159 // pred_region
          %s1984 = sand.u32 %s54, 1
          %s1985 = scalar_lea.sflag [#allocation25], %s1984
          %s1986 = sand.u32 %s554, 1
          %s1987 = smul.addr %s1986, 8
          %s1988 = scalar_lea.vmem [#allocation26], %s1987
          %1989 = dma.done %s1985, 128
        $region180: #{tpu_custom_call.1} parent=159 // pred_fallthru
          _
      $region160: #{tpu_custom_call.1} parent=5 // pred_fallthru
        _
    $region6: #{tpu_custom_call.1} parent=1 // loop_footer
      %s52 = sadd.s32 1, %s48
    $region7: #{tpu_custom_call.1} parent=1 // loop_footer_branch
      %47 = sbr.rel target = $region3
    $region8: #{tpu_custom_call.1} parent=1 // loop_exit
      _
    %1990 = vsyncpa [#allocation3], 1
    %s1991 = scalar_lea.sflag [#allocation3], 1
    %1992 = vsyncpa %s1991, 1
    %1993 = vsyncpa [#allocation6], 1
    %s1994 = scalar_lea.sflag [#allocation6], 1
    %1995 = vsyncpa %s1994, 1
    %1996 = vsyncpa [#allocation9], 1
    %1997 = vsyncpa [#allocation12], 1
    %1998 = vsyncpa [#allocation15], 1
    %1999 = vsyncpa [#allocation18], 1
    %2000 = vsyncpa [#allocation4], 1
    %s2001 = scalar_lea.sflag [#allocation4], 1
    %2002 = vsyncpa %s2001, 1
    %2003 = vsyncpa [#allocation22], 1
    %s2004 = scalar_lea.sflag [#allocation22], 1
    %2005 = vsyncpa %s2004, 1
    %2006 = vsyncpa [#allocation25], 1
    %s2007 = scalar_lea.sflag [#allocation25], 1
    %2008 = vsyncpa %s2007, 1

</llo_original>
